<compile_context>
chip_gen: v6e
topology: v6e:2x2x1
jax: 0.10.0
libtpu: 0.0.40
codegen_flags: <defaults>
</compile_context>

<pallas_src>
import functools

import jax
import jax.numpy as jnp
import numpy as np
from jax.experimental import pallas as pl
from jax.experimental.pallas import tpu as pltpu

LN_EPS = 1e-5


# ----------------------------------------------------------------------------
# Generic fused ResidualAdd:  out = fn(x_tile, *params) + x_tile
# ----------------------------------------------------------------------------
def _residual_add_kernel(fn, n_params, *refs):
    x_ref = refs[0]
    p_refs = refs[1:1 + n_params]
    o_ref = refs[1 + n_params]
    x = x_ref[...].astype(jnp.float32)
    y = fn(x, *(r[...] for r in p_refs))
    o_ref[...] = (y + x).astype(o_ref.dtype)


def _resident_param_spec(shape, ndim):
    """Constant-index, single-buffered BlockSpec for VMEM-resident params."""
    idx_map = lambda i, nd=ndim: (0,) * nd
    try:
        return pl.BlockSpec(shape, idx_map, pipeline_mode=pl.Buffered(1))
    except TypeError:  # older JAX without pipeline_mode kwarg
        return pl.BlockSpec(shape, idx_map)


def residual_add(fn, x2d, params, *, block_rows=256, extra_vmem_bytes=0):
    """Fused  fn(x) + x  over an (M, D) slab, tiled along rows.

    `fn(x_tile, *param_arrays) -> (rows, D)` must be row-wise (each output row
    depends only on its input row) so row-tiling is valid.  Params are small
    2-D arrays; constant index_map + Buffered(1) keeps them resident in VMEM
    across grid steps with a single buffer.
    """
    M, D = x2d.shape

    # Tile selection: biggest tile <= block_rows (multiple of 8), but never let
    # the row grid collapse to a single step -- the two v7x TensorCores split
    # the "parallel" grid axis, so grid=(1,) would idle one of them.
    bm = max(8, min(block_rows, M))
    bm = -(-bm // 8) * 8                       # round up to a sublane multiple
    while bm > 8 and -(-M // bm) < 2:
        bm = max(8, (bm // 2 // 8) * 8)

    pad = (-M) % bm
    if pad:
        x2d = jnp.pad(x2d, ((0, pad), (0, 0)))
    Mp = M + pad
    grid = (Mp // bm,)

    x_spec = pl.BlockSpec((bm, D), lambda i: (i, 0))
    param_specs = [_resident_param_spec(p.shape, p.ndim) for p in params]

    # Explicit VMEM budget: double-buffered x/out tiles + single-buffered
    # params + caller-supplied headroom for fn's f32 intermediates.
    tile_bytes = bm * D * x2d.dtype.itemsize
    param_bytes = sum(int(np.prod(p.shape)) * p.dtype.itemsize for p in params)
    est = 4 * tile_bytes + param_bytes + extra_vmem_bytes + (4 << 20)
    vmem_limit = int(min(max(est, 32 << 20), 64 << 20))

    out = pl.pallas_call(
        functools.partial(_residual_add_kernel, fn, len(params)),
        out_shape=jax.ShapeDtypeStruct((Mp, D), x2d.dtype),
        grid=grid,
        in_specs=[x_spec] + param_specs,
        out_specs=pl.BlockSpec((bm, D), lambda i: (i, 0)),
        compiler_params=pltpu.CompilerParams(
            dimension_semantics=("parallel",),
            vmem_limit_bytes=vmem_limit),
    )(x2d, *params)

    return out[:M] if pad else out


# ----------------------------------------------------------------------------
# Concrete wrapped fn: pre-norm feed-forward block (LayerNorm folded into W1).
# ----------------------------------------------------------------------------
def _prenorm_ffn(x, w1, b1, w2, b2):
    # x: (rows, D) f32.  w1/w2 are bf16 (MXU-native); b1/b2 are f32.
    # LayerNorm's gamma/beta are already folded into w1/b1.
    inv_d = 1.0 / x.shape[-1]
    mu = jnp.sum(x, axis=-1, keepdims=True) * inv_d
    ex2 = jnp.sum(x * x, axis=-1, keepdims=True) * inv_d
    var = jnp.maximum(ex2 - mu * mu, 0.0)          # one-pass variance
    xn = (x - mu) * jax.lax.rsqrt(var + LN_EPS)
    # bf16 operands into the MXU, f32 accumulation and f32 epilogue.
    h = jnp.dot(xn.astype(w1.dtype), w1,
                preferred_element_type=jnp.float32) + b1
    h = jax.nn.gelu(h, approximate=True)
    y = jnp.dot(h.astype(w2.dtype), w2,
                preferred_element_type=jnp.float32) + b2
    return y


def residual_ffn_forward(x, gamma, beta, W1, b1, W2, b2, *, block_rows=256):
    """ResidualAdd(Sequential(LayerNorm(D), Linear(D,H), GELU, Dropout,
    Linear(H,D), Dropout)) -- eval-mode forward, one fused Pallas kernel."""
    B, S, D = x.shape
    H = W1.shape[1]
    # Fold LayerNorm affine into the first Linear (host-side, one-time):
    #   (xn * gamma + beta) @ W1 + b1 == xn @ (gamma[:,None] * W1) + (beta @ W1 + b1)
    w1f = (gamma[:, None] * W1).astype(jnp.bfloat16)     # MXU-native weights
    b1f = (beta @ W1 + b1).astype(jnp.float32)
    w2f = W2.astype(jnp.bfloat16)
    params = (w1f, b1f[None, :], w2f, b2.astype(jnp.float32)[None, :])
    x2d = x.reshape(B * S, D)
    # TODO(synk): if D (or H) is not a multiple of 128, pad lanes here (with
    # masked LN statistics) so the output stays lane-dense (unmasked vst).
    extra = 2 * block_rows * H * 4  # f32 hidden-activation headroom per tile
    out = residual_add(_prenorm_ffn, x2d, params,
                       block_rows=block_rows, extra_vmem_bytes=extra)
    return out.reshape(B, S, D)


# ----------------------------------------------------------------------------
# Pure-JAX reference (mirrors PyTorch eval-mode ResidualAdd(fn) semantics).
# ----------------------------------------------------------------------------
def residual_ffn_reference(x, gamma, beta, W1, b1, W2, b2):
    mu = jnp.mean(x, axis=-1, keepdims=True)
    var = jnp.mean((x - mu) ** 2, axis=-1, keepdims=True)
    xn = (x - mu) / jnp.sqrt(var + LN_EPS) * gamma + beta
    h = jax.nn.gelu(xn @ W1 + b1, approximate=True)
    y = h @ W2 + b2
    return y + x  # residual add (dropout = identity in eval mode)


if __name__ == "__main__":
    # Small demo shapes: 2 x 128 tokens, emb D=128 (lane-dense), hidden H=512.
    # M = 256 rows -> bm=128, grid=(2,) so both v7x TensorCores get work.
    B, S, D, H = 2, 128, 128, 512

    key = jax.random.PRNGKey(0)
    ks = jax.random.split(key, 8)

    x = jax.random.normal(ks[0], (B, S, D), dtype=jnp.float32)
    gamma = 1.0 + 0.1 * jax.random.normal(ks[1], (D,), dtype=jnp.float32)
    beta = 0.1 * jax.random.normal(ks[2], (D,), dtype=jnp.float32)
    W1 = (1.0 / np.sqrt(D)) * jax.random.normal(ks[3], (D, H), dtype=jnp.float32)
    b1 = 0.1 * jax.random.normal(ks[4], (H,), dtype=jnp.float32)
    W2 = (1.0 / np.sqrt(H)) * jax.random.normal(ks[5], (H, D), dtype=jnp.float32)
    b2 = 0.1 * jax.random.normal(ks[6], (D,), dtype=jnp.float32)

    y = jax.jit(residual_ffn_forward)(x, gamma, beta, W1, b1, W2, b2)
    y = jax.block_until_ready(y)
    assert y.shape == (B, S, D), y.shape

    y_ref = residual_ffn_reference(x, gamma, beta, W1, b1, W2, b2)
    # bf16 matmul operands (f32 accumulation) -> relaxed tolerance vs f32 ref.
    np.testing.assert_allclose(np.asarray(y), np.asarray(y_ref),
                               rtol=2e-2, atol=2e-2)
    print("KERNEL_OK")
</pallas_src>

<mosaic_0001>
module attributes {stable_mosaic.version = 11 : i64} {
  func.func @_residual_add_kernel(%arg0: i32, %arg1: memref<128x128xf32, #tpu.memory_space<vmem>>, %arg2: memref<128x512xbf16, #tpu.memory_space<vmem>>, %arg3: memref<1x512xf32, #tpu.memory_space<vmem>>, %arg4: memref<512x128xbf16, #tpu.memory_space<vmem>>, %arg5: memref<1x128xf32, #tpu.memory_space<vmem>>, %arg6: memref<128x128xf32, #tpu.memory_space<vmem>>) attributes {dimension_semantics = [#tpu.dimension_semantics<parallel>], iteration_bounds = array<i64: 2>, scalar_prefetch = 0 : i64, scratch_operands = 0 : i64, tpu.core_type = #tpu.core_type<tc>, window_params = [{transform_indices = @transform_0, window_bounds = array<i64: 128, 128>}, {pipeline_mode = #tpu.pipeline_mode<synchronous>, transform_indices = @transform_1, window_bounds = array<i64: 128, 512>}, {pipeline_mode = #tpu.pipeline_mode<synchronous>, transform_indices = @transform_2, window_bounds = array<i64: 1, 512>}, {pipeline_mode = #tpu.pipeline_mode<synchronous>, transform_indices = @transform_3, window_bounds = array<i64: 512, 128>}, {pipeline_mode = #tpu.pipeline_mode<synchronous>, transform_indices = @transform_4, window_bounds = array<i64: 1, 128>}, {transform_indices = @transform_5, window_bounds = array<i64: 128, 128>}]} {
    %c0 = arith.constant 0 : index
    %c0_0 = arith.constant 0 : index
    %0 = vector.load %arg1[%c0, %c0_0] : memref<128x128xf32, #tpu.memory_space<vmem>>, vector<128x128xf32>
    %c0_1 = arith.constant 0 : index
    %c0_2 = arith.constant 0 : index
    %1 = vector.load %arg2[%c0_1, %c0_2] : memref<128x512xbf16, #tpu.memory_space<vmem>>, vector<128x512xbf16>
    %c0_3 = arith.constant 0 : index
    %c0_4 = arith.constant 0 : index
    %2 = vector.load %arg3[%c0_3, %c0_4] : memref<1x512xf32, #tpu.memory_space<vmem>>, vector<1x512xf32>
    %c0_5 = arith.constant 0 : index
    %c0_6 = arith.constant 0 : index
    %3 = vector.load %arg4[%c0_5, %c0_6] : memref<512x128xbf16, #tpu.memory_space<vmem>>, vector<512x128xbf16>
    %c0_7 = arith.constant 0 : index
    %c0_8 = arith.constant 0 : index
    %4 = vector.load %arg5[%c0_7, %c0_8] : memref<1x128xf32, #tpu.memory_space<vmem>>, vector<1x128xf32>
    %cst = arith.constant dense<0.000000e+00> : vector<128xf32>
    %5 = vector.multi_reduction <add>, %0, %cst [1] : vector<128x128xf32> to vector<128xf32>
    %6 = vector.shape_cast %5 : vector<128xf32> to vector<128x1xf32>
    %cst_9 = arith.constant 7.812500e-03 : f32
    %7 = vector.broadcast %cst_9 : f32 to vector<128x1xf32>
    %8 = arith.mulf %6, %7 : vector<128x1xf32>
    %9 = arith.mulf %0, %0 : vector<128x128xf32>
    %cst_10 = arith.constant dense<0.000000e+00> : vector<128xf32>
    %10 = vector.multi_reduction <add>, %9, %cst_10 [1] : vector<128x128xf32> to vector<128xf32>
    %11 = vector.shape_cast %10 : vector<128xf32> to vector<128x1xf32>
    %cst_11 = arith.constant 7.812500e-03 : f32
    %12 = vector.broadcast %cst_11 : f32 to vector<128x1xf32>
    %13 = arith.mulf %11, %12 : vector<128x1xf32>
    %14 = arith.mulf %8, %8 : vector<128x1xf32>
    %15 = arith.subf %13, %14 : vector<128x1xf32>
    %cst_12 = arith.constant 0.000000e+00 : f32
    %16 = vector.broadcast %cst_12 : f32 to vector<128x1xf32>
    %17 = arith.maximumf %15, %16 : vector<128x1xf32>
    %18 = vector.broadcast %8 : vector<128x1xf32> to vector<128x128xf32>
    %19 = arith.subf %0, %18 : vector<128x128xf32>
    %cst_13 = arith.constant 9.99999974E-6 : f32
    %20 = vector.broadcast %cst_13 : f32 to vector<128x1xf32>
    %21 = arith.addf %17, %20 : vector<128x1xf32>
    %22 = math.rsqrt %21 : vector<128x1xf32>
    %23 = vector.broadcast %22 : vector<128x1xf32> to vector<128x128xf32>
    %24 = arith.mulf %19, %23 : vector<128x128xf32>
    %25 = arith.truncf %24 : vector<128x128xf32> to vector<128x128xbf16>
    %cst_14 = arith.constant dense<0.000000e+00> : vector<128x512xf32>
    %26 = tpu.matmul %25, %1, %cst_14 {dimension_numbers = #tpu.dot_dimension_numbers<[1], [0], [0], [1], [0, 0, 1, 1], [], []>} : vector<128x128xbf16>, vector<128x512xbf16>, vector<128x512xf32> -> vector<128x512xf32>
    %27 = vector.broadcast %2 : vector<1x512xf32> to vector<128x512xf32>
    %28 = arith.addf %26, %27 : vector<128x512xf32>
    %29 = arith.mulf %28, %28 : vector<128x512xf32>
    %30 = arith.mulf %28, %29 : vector<128x512xf32>
    %cst_15 = arith.constant 4.471500e-02 : f32
    %31 = vector.broadcast %cst_15 : f32 to vector<128x512xf32>
    %32 = arith.mulf %31, %30 : vector<128x512xf32>
    %33 = arith.addf %28, %32 : vector<128x512xf32>
    %cst_16 = arith.constant 0.797884583 : f32
    %34 = vector.broadcast %cst_16 : f32 to vector<128x512xf32>
    %35 = arith.mulf %34, %33 : vector<128x512xf32>
    %36 = math.tanh %35 : vector<128x512xf32>
    %cst_17 = arith.constant 1.000000e+00 : f32
    %37 = vector.broadcast %cst_17 : f32 to vector<128x512xf32>
    %38 = arith.addf %37, %36 : vector<128x512xf32>
    %cst_18 = arith.constant 5.000000e-01 : f32
    %39 = vector.broadcast %cst_18 : f32 to vector<128x512xf32>
    %40 = arith.mulf %39, %38 : vector<128x512xf32>
    %41 = arith.mulf %28, %40 : vector<128x512xf32>
    %42 = arith.truncf %41 : vector<128x512xf32> to vector<128x512xbf16>
    %cst_19 = arith.constant dense<0.000000e+00> : vector<128x128xf32>
    %43 = tpu.matmul %42, %3, %cst_19 {dimension_numbers = #tpu.dot_dimension_numbers<[1], [0], [0], [1], [0, 0, 1, 1], [], []>} : vector<128x512xbf16>, vector<512x128xbf16>, vector<128x128xf32> -> vector<128x128xf32>
    %44 = vector.broadcast %4 : vector<1x128xf32> to vector<128x128xf32>
    %45 = arith.addf %43, %44 : vector<128x128xf32>
    %46 = arith.addf %45, %0 : vector<128x128xf32>
    %c0_20 = arith.constant 0 : index
    %c0_21 = arith.constant 0 : index
    %47 = vector.load %arg6[%c0_20, %c0_21] : memref<128x128xf32, #tpu.memory_space<vmem>>, vector<128x128xf32>
    tpu.vector_store %arg6[%c0_20, %c0_21], %46 {strides = array<i32>} : memref<128x128xf32, #tpu.memory_space<vmem>>, vector<128x128xf32>,
    return
  }
  func.func @transform_0(%arg0: i32) -> (i32, i32) {
    %c0_i32 = arith.constant 0 : i32
    %c0_i32_0 = arith.constant 0 : i32
    return %arg0, %c0_i32 : i32, i32
  }
  func.func @transform_1(%arg0: i32) -> (i32, i32) {
    %c0_i32 = arith.constant 0 : i32
    %c0_i32_0 = arith.constant 0 : i32
    %c0_i32_1 = arith.constant 0 : i32
    return %c0_i32, %c0_i32_0 : i32, i32
  }
  func.func @transform_2(%arg0: i32) -> (i32, i32) {
    %c0_i32 = arith.constant 0 : i32
    %c0_i32_0 = arith.constant 0 : i32
    %c0_i32_1 = arith.constant 0 : i32
    return %c0_i32, %c0_i32_0 : i32, i32
  }
  func.func @transform_3(%arg0: i32) -> (i32, i32) {
    %c0_i32 = arith.constant 0 : i32
    %c0_i32_0 = arith.constant 0 : i32
    %c0_i32_1 = arith.constant 0 : i32
    return %c0_i32, %c0_i32_0 : i32, i32
  }
  func.func @transform_4(%arg0: i32) -> (i32, i32) {
    %c0_i32 = arith.constant 0 : i32
    %c0_i32_0 = arith.constant 0 : i32
    %c0_i32_1 = arith.constant 0 : i32
    return %c0_i32, %c0_i32_0 : i32, i32
  }
  func.func @transform_5(%arg0: i32) -> (i32, i32) {
    %c0_i32 = arith.constant 0 : i32
    %c0_i32_0 = arith.constant 0 : i32
    return %arg0, %c0_i32 : i32, i32
  }
}

</mosaic_0001>

<llo_original>
// kernel: residual_ffn_forward.1
$region0: #{residual_ffn_forward.1}
  #allocation0 [shape = 'u32[]', space=smem, size = 0x4, offset = 0x4, fixed_abs, tag = 'smem constant byte address 0x4 - core index']
  #allocation1 [shape = 'u32[144,128]{1,0:T(1,128)}', space=vmem, size = 0x12000, scoped, tag = 'internal scratch']
  %s0 = inlined_call_operand.vmem [shape: f32[256,128], index: 0, kind: input, shape index: {}]
  %s1 = inlined_call_operand.vmem [shape: bf16[128,512], index: 1, kind: input, shape index: {}]
  %s2 = inlined_call_operand.vmem [shape: f32[1,512], index: 2, kind: input, shape index: {}]
  %s3 = inlined_call_operand.vmem [shape: bf16[512,128], index: 3, kind: input, shape index: {}]
  %s4 = inlined_call_operand.vmem [shape: f32[1,128], index: 4, kind: input, shape index: {}]
  %s5 = inlined_call_operand.hbm [shape: f32[256,128], index: 5, kind: output, shape index: {}]
  %s6 = sld [smem:[#allocation0]]
  $region53: #{residual_ffn_forward.1} parent=0
    _
  %s8 = ssub.s32 1, %s6
  %s9 = scalar_select 0, %s8, %s6
  $region1: #{residual_ffn_forward.1} parent=0
    #allocation2 [shape = 'u8[131072]{0}', space=vmem, size = 0x20000, scoped, tag = 'output window, operand 0']
    #allocation3 [shape = 's32[2]{0}', space=sflag, size = 0x8, scoped, tag = 'scoped memory for residual_ffn_forward.1']
    %10 = vsyncpa [#allocation3], 0
    %s11 = scalar_lea.sflag [#allocation3], 1
    %12 = vsyncpa %s11, 0
    loop: start=0, step=1, limit=4
    $region2: #{residual_ffn_forward.1} parent=1 // loop_pre_header
      _
    $region3: #{residual_ffn_forward.1} parent=1 // loop_header
      %s14 = sphi 0, %s18
      %p15 = scmp.ge.s32.totalorder %s14, 4
      %s24 = sphi 0, %s26
      %s27 = sphi 0, %s24
      %s28 = sphi 0, %s27
      %s44 = sphi 0, %s28
      %s48 = sphi 0, %s48
      %s50 = sphi 0, %s48
      %s51 = sphi 0, %s50
      %s65 = sphi 0, %s51
      %s69 = sphi 0, %s69
      %s71 = sphi 0, %s69
      %s72 = sphi 0, %s71
      %s86 = sphi 0, %s72
      %s90 = sphi 0, %s90
      %s92 = sphi 0, %s90
      %s93 = sphi 0, %s92
      %s107 = sphi 0, %s93
      %s111 = sphi 0, %s111
      %s113 = sphi 0, %s111
      %s114 = sphi 0, %s113
      %s128 = sphi 0, %s114
      %s134 = sphi 0, %s136
      %s137 = sphi 0, %s134
      %s138 = sphi 0, %s137
      %s154 = sphi 0, %s138
    $region4: #{residual_ffn_forward.1} parent=1 // loop_header_branch
      %17 = sbr.rel (%p15) target = $region8
    $region5: #{residual_ffn_forward.1} parent=1 // loop_body
      %s19 = ssub.s32 %s14, 1
      %s20 = ssub.s32 %s14, 2
      %s21 = sadd.s32 %s14, 1
      %s22 = ssub.s32 %s14, %s21
      %p23 = scmp.eq.s32.totalorder %s22, 0
      %s25 = sadd.s32 %s24, 1
      %s26 = scalar_select %p23, %s24, %s25
      %p29 = pneg %p23
      %p30 = scmp.eq.s32.totalorder %s14, 1
      %p31 = por %p29, %p30
      %p32 = scmp.ne.s32.totalorder %s24, %s27
      %p33 = scmp.eq.s32.totalorder %s14, 0
      %p34 = por %p32, %p33
      %p35 = scmp.ne.s32.totalorder %s24, %s27
      %p36 = scmp.eq.s32.totalorder %s19, 1
      %p37 = por %p35, %p36
      %p38 = scmp.ne.s32.totalorder %s27, %s28
      %p39 = scmp.eq.s32.totalorder %s19, 0
      %p40 = por %p38, %p39
      %p41 = scmp.ne.s32.totalorder %s27, %s28
      %p42 = scmp.eq.s32.totalorder %s20, 1
      %p43 = por %p41, %p42
      %p45 = scmp.ne.s32.totalorder %s28, %s44
      %p46 = scmp.eq.s32.totalorder %s20, 0
      %p47 = por %p45, %p46
      %s49 = sadd.s32 %s48, 1
      %p52 = scmp.eq.s32.totalorder %s14, 1
      %p53 = scmp.ne.s32.totalorder %s48, %s50
      %p54 = scmp.eq.s32.totalorder %s14, 0
      %p55 = por %p53, %p54
      %p56 = scmp.ne.s32.totalorder %s48, %s50
      %p57 = scmp.eq.s32.totalorder %s19, 1
      %p58 = por %p56, %p57
      %p59 = scmp.ne.s32.totalorder %s50, %s51
      %p60 = scmp.eq.s32.totalorder %s19, 0
      %p61 = por %p59, %p60
      %p62 = scmp.ne.s32.totalorder %s50, %s51
      %p63 = scmp.eq.s32.totalorder %s20, 1
      %p64 = por %p62, %p63
      %p66 = scmp.ne.s32.totalorder %s51, %s65
      %p67 = scmp.eq.s32.totalorder %s20, 0
      %p68 = por %p66, %p67
      %s70 = sadd.s32 %s69, 1
      %p73 = scmp.eq.s32.totalorder %s14, 1
      %p74 = scmp.ne.s32.totalorder %s69, %s71
      %p75 = scmp.eq.s32.totalorder %s14, 0
      %p76 = por %p74, %p75
      %p77 = scmp.ne.s32.totalorder %s69, %s71
      %p78 = scmp.eq.s32.totalorder %s19, 1
      %p79 = por %p77, %p78
      %p80 = scmp.ne.s32.totalorder %s71, %s72
      %p81 = scmp.eq.s32.totalorder %s19, 0
      %p82 = por %p80, %p81
      %p83 = scmp.ne.s32.totalorder %s71, %s72
      %p84 = scmp.eq.s32.totalorder %s20, 1
      %p85 = por %p83, %p84
      %p87 = scmp.ne.s32.totalorder %s72, %s86
      %p88 = scmp.eq.s32.totalorder %s20, 0
      %p89 = por %p87, %p88
      %s91 = sadd.s32 %s90, 1
      %p94 = scmp.eq.s32.totalorder %s14, 1
      %p95 = scmp.ne.s32.totalorder %s90, %s92
      %p96 = scmp.eq.s32.totalorder %s14, 0
      %p97 = por %p95, %p96
      %p98 = scmp.ne.s32.totalorder %s90, %s92
      %p99 = scmp.eq.s32.totalorder %s19, 1
      %p100 = por %p98, %p99
      %p101 = scmp.ne.s32.totalorder %s92, %s93
      %p102 = scmp.eq.s32.totalorder %s19, 0
      %p103 = por %p101, %p102
      %p104 = scmp.ne.s32.totalorder %s92, %s93
      %p105 = scmp.eq.s32.totalorder %s20, 1
      %p106 = por %p104, %p105
      %p108 = scmp.ne.s32.totalorder %s93, %s107
      %p109 = scmp.eq.s32.totalorder %s20, 0
      %p110 = por %p108, %p109
      %s112 = sadd.s32 %s111, 1
      %p115 = scmp.eq.s32.totalorder %s14, 1
      %p116 = scmp.ne.s32.totalorder %s111, %s113
      %p117 = scmp.eq.s32.totalorder %s14, 0
      %p118 = por %p116, %p117
      %p119 = scmp.ne.s32.totalorder %s111, %s113
      %p120 = scmp.eq.s32.totalorder %s19, 1
      %p121 = por %p119, %p120
      %p122 = scmp.ne.s32.totalorder %s113, %s114
      %p123 = scmp.eq.s32.totalorder %s19, 0
      %p124 = por %p122, %p123
      %p125 = scmp.ne.s32.totalorder %s113, %s114
      %p126 = scmp.eq.s32.totalorder %s20, 1
      %p127 = por %p125, %p126
      %p129 = scmp.ne.s32.totalorder %s114, %s128
      %p130 = scmp.eq.s32.totalorder %s20, 0
      %p131 = por %p129, %p130
      %s132 = ssub.s32 %s14, %s21
      %p133 = scmp.eq.s32.totalorder %s132, 0
      %s135 = sadd.s32 %s134, 1
      %s136 = scalar_select %p133, %s134, %s135
      %p139 = pneg %p133
      %p140 = scmp.eq.s32.totalorder %s14, 1
      %p141 = por %p139, %p140
      %p142 = scmp.ne.s32.totalorder %s134, %s137
      %p143 = scmp.eq.s32.totalorder %s14, 0
      %p144 = por %p142, %p143
      %p145 = scmp.ne.s32.totalorder %s134, %s137
      %p146 = scmp.eq.s32.totalorder %s19, 1
      %p147 = por %p145, %p146
      %p148 = scmp.ne.s32.totalorder %s137, %s138
      %p149 = scmp.eq.s32.totalorder %s19, 0
      %p150 = por %p148, %p149
      %p151 = scmp.ne.s32.totalorder %s137, %s138
      %p152 = scmp.eq.s32.totalorder %s20, 1
      %p153 = por %p151, %p152
      %p155 = scmp.ne.s32.totalorder %s138, %s154
      %p156 = scmp.eq.s32.totalorder %s20, 0
      %p157 = por %p155, %p156
      %p158 = scmp.le.s32.totalorder 1, %s14
      %p159 = scmp.lt.s32.totalorder %s14, 3
      %p160 = pnand %p158, %p159
      %p161 = pneg %p160
      // Predicated region
      $region9: #{residual_ffn_forward.1} parent=5 // pred_check
        _
      $region10: #{residual_ffn_forward.1} parent=5 // pred_check_branch
        %163 = sbr.rel (%p160) target = $region12
      $region11: #{residual_ffn_forward.1} parent=5 // pred_region
        %s164 = ssub.s32 %s14, 1
        // Predicated region
        $region13: #{residual_ffn_forward.1} parent=11 // pred_check
          %p165 = pneg %p61
        $region14: #{residual_ffn_forward.1} parent=11 // pred_check_branch
          %167 = sbr.rel (%p165) target = $region16
        $region15: #{residual_ffn_forward.1} parent=11 // pred_region
          _
        $region16: #{residual_ffn_forward.1} parent=11 // pred_fallthru
          _
        // Predicated region
        $region17: #{residual_ffn_forward.1} parent=11 // pred_check
          %p168 = pneg %p82
        $region18: #{residual_ffn_forward.1} parent=11 // pred_check_branch
          %170 = sbr.rel (%p168) target = $region20
        $region19: #{residual_ffn_forward.1} parent=11 // pred_region
          _
        $region20: #{residual_ffn_forward.1} parent=11 // pred_fallthru
          _
        // Predicated region
        $region21: #{residual_ffn_forward.1} parent=11 // pred_check
          %p171 = pneg %p103
        $region22: #{residual_ffn_forward.1} parent=11 // pred_check_branch
          %173 = sbr.rel (%p171) target = $region24
        $region23: #{residual_ffn_forward.1} parent=11 // pred_region
          _
        $region24: #{residual_ffn_forward.1} parent=11 // pred_fallthru
          _
        // Predicated region
        $region25: #{residual_ffn_forward.1} parent=11 // pred_check
          %p174 = pneg %p124
        $region26: #{residual_ffn_forward.1} parent=11 // pred_check_branch
          %176 = sbr.rel (%p174) target = $region28
        $region27: #{residual_ffn_forward.1} parent=11 // pred_region
          _
        $region28: #{residual_ffn_forward.1} parent=11 // pred_fallthru
          _
      $region12: #{residual_ffn_forward.1} parent=5 // pred_fallthru
        _
      %p177 = scmp.lt.s32.totalorder %s14, 2
      // Predicated region
      $region29: #{residual_ffn_forward.1} parent=5 // pred_check
        %p178 = pneg %p177
      $region30: #{residual_ffn_forward.1} parent=5 // pred_check_branch
        %180 = sbr.rel (%p178) target = $region32
      $region31: #{residual_ffn_forward.1} parent=5 // pred_region
        // Predicated region
        $region33: #{residual_ffn_forward.1} parent=31 // pred_check
          %p181 = pneg %p34
        $region34: #{residual_ffn_forward.1} parent=31 // pred_check_branch
          %183 = sbr.rel (%p181) target = $region36
        $region35: #{residual_ffn_forward.1} parent=31 // pred_region
          %s184 = smul.u32 16, %s14
          %p185 = scmp.lt.s32.totalorder %s184, 31
          %s186 = scalar_select %p185, %s184, 31
          %s187 = smul.addr %s186, 8
          %s188 = scalar_lea.vmem %s0, %s187
          %s189 = smul.u32 16, %s14
        $region36: #{residual_ffn_forward.1} parent=31 // pred_fallthru
          _
      $region32: #{residual_ffn_forward.1} parent=5 // pred_fallthru
        _
      %p190 = scmp.le.s32.totalorder 1, %s14
      %p191 = scmp.lt.s32.totalorder %s14, 3
      %p192 = pnand %p190, %p191
      %p193 = pneg %p192
      // Predicated region
      $region37: #{residual_ffn_forward.1} parent=5 // pred_check
        _
      $region38: #{residual_ffn_forward.1} parent=5 // pred_check_branch
        %195 = sbr.rel (%p192) target = $region40
      $region39: #{residual_ffn_forward.1} parent=5 // pred_region
        %s196 = ssub.s32 %s14, 1
        %s197 = smul.u32 16, %s19
        %p198 = scmp.lt.s32.totalorder %s197, 31
        %s199 = scalar_select %p198, %s197, 31
        %s200 = smul.addr %s199, 8
        %s201 = scalar_lea.vmem %s0, %s200
        %p202 = pneg %p40
        %p203 = pneg %p37
        %p204 = pneg %p61
        %p205 = pneg %p58
        %p206 = pneg %p82
        %p207 = pneg %p79
        %p208 = pneg %p103
        %p209 = pneg %p100
        %p210 = pneg %p124
        %p211 = pneg %p121
        %p212 = pneg %p150
        %p213 = pneg %p147
        %s214 = sand.u32 %s137, 1
        %s215 = scalar_lea.sflag [#allocation3], %s214
        %s216 = sand.u32 %s137, 1
        %s217 = smul.addr %s216, 128
        %s218 = scalar_lea.vmem [#allocation2], %s217
        %s219 = smul.u32 16, %s19
        %p220 = scmp.lt.s32.totalorder %s219, 31
        %s221 = scalar_select %p220, %s219, 31
        %s222 = smul.addr %s221, 8
        %s223 = scalar_lea.vmem %s0, %s222
        %s224 = smul.u32 16, %s19
        %s225 = smul.u32 16, %s19
        %v227 = vld [vmem:[%s223] sm:$0xff]
        %v228 = vld [vmem:[%s223 + $0x8] sm:$0xff]
        %v229 = vld [vmem:[%s223 + $0x10] sm:$0xff]
        %v230 = vld [vmem:[%s223 + $0x18] sm:$0xff]
        %v231 = vld [vmem:[%s223 + $0x20] sm:$0xff]
        %v232 = vld [vmem:[%s223 + $0x28] sm:$0xff]
        %v233 = vld [vmem:[%s223 + $0x30] sm:$0xff]
        %v234 = vld [vmem:[%s223 + $0x38] sm:$0xff]
        %v235 = vld [vmem:[%s223 + $0x40] sm:$0xff]
        %v236 = vld [vmem:[%s223 + $0x48] sm:$0xff]
        %v237 = vld [vmem:[%s223 + $0x50] sm:$0xff]
        %v238 = vld [vmem:[%s223 + $0x58] sm:$0xff]
        %v239 = vld [vmem:[%s223 + $0x60] sm:$0xff]
        %v240 = vld [vmem:[%s223 + $0x68] sm:$0xff]
        %v241 = vld [vmem:[%s223 + $0x70] sm:$0xff]
        %v242 = vld [vmem:[%s223 + $0x78] sm:$0xff]
        %v243 = vld [vmem:[%s1] sm:$0xff]
        %v244 = vld [vmem:[%s1 + $0x8] sm:$0xff]
        %v245 = vld [vmem:[%s1 + $0x10] sm:$0xff]
        %v246 = vld [vmem:[%s1 + $0x18] sm:$0xff]
        %v247 = vld [vmem:[%s1 + $0x20] sm:$0xff]
        %v248 = vld [vmem:[%s1 + $0x28] sm:$0xff]
        %v249 = vld [vmem:[%s1 + $0x30] sm:$0xff]
        %v250 = vld [vmem:[%s1 + $0x38] sm:$0xff]
        %v251 = vld [vmem:[%s1 + $0x40] sm:$0xff]
        %v252 = vld [vmem:[%s1 + $0x48] sm:$0xff]
        %v253 = vld [vmem:[%s1 + $0x50] sm:$0xff]
        %v254 = vld [vmem:[%s1 + $0x58] sm:$0xff]
        %v255 = vld [vmem:[%s1 + $0x60] sm:$0xff]
        %v256 = vld [vmem:[%s1 + $0x68] sm:$0xff]
        %v257 = vld [vmem:[%s1 + $0x70] sm:$0xff]
        %v258 = vld [vmem:[%s1 + $0x78] sm:$0xff]
        %v259 = vld [vmem:[%s1 + $0x80] sm:$0xff]
        %v260 = vld [vmem:[%s1 + $0x88] sm:$0xff]
        %v261 = vld [vmem:[%s1 + $0x90] sm:$0xff]
        %v262 = vld [vmem:[%s1 + $0x98] sm:$0xff]
        %v263 = vld [vmem:[%s1 + $0xa0] sm:$0xff]
        %v264 = vld [vmem:[%s1 + $0xa8] sm:$0xff]
        %v265 = vld [vmem:[%s1 + $0xb0] sm:$0xff]
        %v266 = vld [vmem:[%s1 + $0xb8] sm:$0xff]
        %v267 = vld [vmem:[%s1 + $0xc0] sm:$0xff]
        %v268 = vld [vmem:[%s1 + $0xc8] sm:$0xff]
        %v269 = vld [vmem:[%s1 + $0xd0] sm:$0xff]
        %v270 = vld [vmem:[%s1 + $0xd8] sm:$0xff]
        %v271 = vld [vmem:[%s1 + $0xe0] sm:$0xff]
        %v272 = vld [vmem:[%s1 + $0xe8] sm:$0xff]
        %v273 = vld [vmem:[%s1 + $0xf0] sm:$0xff]
        %v274 = vld [vmem:[%s1 + $0xf8] sm:$0xff]
        %v275 = vld [vmem:[%s2] sm:$0xf]
        %v276 = vld [vmem:[%s3] sm:$0xf]
        %v277 = vld [vmem:[%s3 + $0x4] sm:$0xf]
        %v278 = vld [vmem:[%s3 + $0x8] sm:$0xf]
        %v279 = vld [vmem:[%s3 + $0xc] sm:$0xf]
        %v280 = vld [vmem:[%s3 + $0x10] sm:$0xf]
        %v281 = vld [vmem:[%s3 + $0x14] sm:$0xf]
        %v282 = vld [vmem:[%s3 + $0x18] sm:$0xf]
        %v283 = vld [vmem:[%s3 + $0x1c] sm:$0xf]
        %v284 = vld [vmem:[%s3 + $0x20] sm:$0xf]
        %v285 = vld [vmem:[%s3 + $0x24] sm:$0xf]
        %v286 = vld [vmem:[%s3 + $0x28] sm:$0xf]
        %v287 = vld [vmem:[%s3 + $0x2c] sm:$0xf]
        %v288 = vld [vmem:[%s3 + $0x30] sm:$0xf]
        %v289 = vld [vmem:[%s3 + $0x34] sm:$0xf]
        %v290 = vld [vmem:[%s3 + $0x38] sm:$0xf]
        %v291 = vld [vmem:[%s3 + $0x3c] sm:$0xf]
        %v292 = vld [vmem:[%s3 + $0x40] sm:$0xf]
        %v293 = vld [vmem:[%s3 + $0x44] sm:$0xf]
        %v294 = vld [vmem:[%s3 + $0x48] sm:$0xf]
        %v295 = vld [vmem:[%s3 + $0x4c] sm:$0xf]
        %v296 = vld [vmem:[%s3 + $0x50] sm:$0xf]
        %v297 = vld [vmem:[%s3 + $0x54] sm:$0xf]
        %v298 = vld [vmem:[%s3 + $0x58] sm:$0xf]
        %v299 = vld [vmem:[%s3 + $0x5c] sm:$0xf]
        %v300 = vld [vmem:[%s3 + $0x60] sm:$0xf]
        %v301 = vld [vmem:[%s3 + $0x64] sm:$0xf]
        %v302 = vld [vmem:[%s3 + $0x68] sm:$0xf]
        %v303 = vld [vmem:[%s3 + $0x6c] sm:$0xf]
        %v304 = vld [vmem:[%s3 + $0x70] sm:$0xf]
        %v305 = vld [vmem:[%s3 + $0x74] sm:$0xf]
        %v306 = vld [vmem:[%s3 + $0x78] sm:$0xf]
        %v307 = vld [vmem:[%s3 + $0x7c] sm:$0xf]
        %v308 = vld [vmem:[%s3 + $0x80] sm:$0xf]
        %v309 = vld [vmem:[%s3 + $0x84] sm:$0xf]
        %v310 = vld [vmem:[%s3 + $0x88] sm:$0xf]
        %v311 = vld [vmem:[%s3 + $0x8c] sm:$0xf]
        %v312 = vld [vmem:[%s3 + $0x90] sm:$0xf]
        %v313 = vld [vmem:[%s3 + $0x94] sm:$0xf]
        %v314 = vld [vmem:[%s3 + $0x98] sm:$0xf]
        %v315 = vld [vmem:[%s3 + $0x9c] sm:$0xf]
        %v316 = vld [vmem:[%s3 + $0xa0] sm:$0xf]
        %v317 = vld [vmem:[%s3 + $0xa4] sm:$0xf]
        %v318 = vld [vmem:[%s3 + $0xa8] sm:$0xf]
        %v319 = vld [vmem:[%s3 + $0xac] sm:$0xf]
        %v320 = vld [vmem:[%s3 + $0xb0] sm:$0xf]
        %v321 = vld [vmem:[%s3 + $0xb4] sm:$0xf]
        %v322 = vld [vmem:[%s3 + $0xb8] sm:$0xf]
        %v323 = vld [vmem:[%s3 + $0xbc] sm:$0xf]
        %v324 = vld [vmem:[%s3 + $0xc0] sm:$0xf]
        %v325 = vld [vmem:[%s3 + $0xc4] sm:$0xf]
        %v326 = vld [vmem:[%s3 + $0xc8] sm:$0xf]
        %v327 = vld [vmem:[%s3 + $0xcc] sm:$0xf]
        %v328 = vld [vmem:[%s3 + $0xd0] sm:$0xf]
        %v329 = vld [vmem:[%s3 + $0xd4] sm:$0xf]
        %v330 = vld [vmem:[%s3 + $0xd8] sm:$0xf]
        %v331 = vld [vmem:[%s3 + $0xdc] sm:$0xf]
        %v332 = vld [vmem:[%s3 + $0xe0] sm:$0xf]
        %v333 = vld [vmem:[%s3 + $0xe4] sm:$0xf]
        %v334 = vld [vmem:[%s3 + $0xe8] sm:$0xf]
        %v335 = vld [vmem:[%s3 + $0xec] sm:$0xf]
        %v336 = vld [vmem:[%s3 + $0xf0] sm:$0xf]
        %v337 = vld [vmem:[%s3 + $0xf4] sm:$0xf]
        %v338 = vld [vmem:[%s3 + $0xf8] sm:$0xf]
        %v339 = vld [vmem:[%s3 + $0xfc] sm:$0xf]
        %v340 = vld [vmem:[%s4] sm:$0x1]
        %341 = vadd.xlane.f32.xlu0 %v227
        %v342 = vpop.xlane.xlu0 %341
        %343 = vadd.xlane.f32.xlu0 %v228
        %v344 = vpop.xlane.xlu0 %343
        %345 = vadd.xlane.f32.xlu0 %v229
        %v346 = vpop.xlane.xlu0 %345
        %347 = vadd.xlane.f32.xlu0 %v230
        %v348 = vpop.xlane.xlu0 %347
        %349 = vadd.xlane.f32.xlu0 %v231
        %v350 = vpop.xlane.xlu0 %349
        %351 = vadd.xlane.f32.xlu0 %v232
        %v352 = vpop.xlane.xlu0 %351
        %353 = vadd.xlane.f32.xlu0 %v233
        %v354 = vpop.xlane.xlu0 %353
        %355 = vadd.xlane.f32.xlu0 %v234
        %v356 = vpop.xlane.xlu0 %355
        %357 = vadd.xlane.f32.xlu0 %v235
        %v358 = vpop.xlane.xlu0 %357
        %359 = vadd.xlane.f32.xlu0 %v236
        %v360 = vpop.xlane.xlu0 %359
        %361 = vadd.xlane.f32.xlu0 %v237
        %v362 = vpop.xlane.xlu0 %361
        %363 = vadd.xlane.f32.xlu0 %v238
        %v364 = vpop.xlane.xlu0 %363
        %365 = vadd.xlane.f32.xlu0 %v239
        %v366 = vpop.xlane.xlu0 %365
        %367 = vadd.xlane.f32.xlu0 %v240
        %v368 = vpop.xlane.xlu0 %367
        %369 = vadd.xlane.f32.xlu0 %v241
        %v370 = vpop.xlane.xlu0 %369
        %371 = vadd.xlane.f32.xlu0 %v242
        %v372 = vpop.xlane.xlu0 %371
        %v373 = vmul.f32 %v342, 0.0078125
        %v374 = vmul.f32 %v344, 0.0078125
        %v375 = vmul.f32 %v346, 0.0078125
        %v376 = vmul.f32 %v348, 0.0078125
        %v377 = vmul.f32 %v350, 0.0078125
        %v378 = vmul.f32 %v352, 0.0078125
        %v379 = vmul.f32 %v354, 0.0078125
        %v380 = vmul.f32 %v356, 0.0078125
        %v381 = vmul.f32 %v358, 0.0078125
        %v382 = vmul.f32 %v360, 0.0078125
        %v383 = vmul.f32 %v362, 0.0078125
        %v384 = vmul.f32 %v364, 0.0078125
        %v385 = vmul.f32 %v366, 0.0078125
        %v386 = vmul.f32 %v368, 0.0078125
        %v387 = vmul.f32 %v370, 0.0078125
        %v388 = vmul.f32 %v372, 0.0078125
        %v389 = vmul.f32 %v227, %v227
        %v390 = vmul.f32 %v228, %v228
        %v391 = vmul.f32 %v229, %v229
        %v392 = vmul.f32 %v230, %v230
        %v393 = vmul.f32 %v231, %v231
        %v394 = vmul.f32 %v232, %v232
        %v395 = vmul.f32 %v233, %v233
        %v396 = vmul.f32 %v234, %v234
        %v397 = vmul.f32 %v235, %v235
        %v398 = vmul.f32 %v236, %v236
        %v399 = vmul.f32 %v237, %v237
        %v400 = vmul.f32 %v238, %v238
        %v401 = vmul.f32 %v239, %v239
        %v402 = vmul.f32 %v240, %v240
        %v403 = vmul.f32 %v241, %v241
        %v404 = vmul.f32 %v242, %v242
        %405 = vadd.xlane.f32.xlu0 %v389
        %v406 = vpop.xlane.xlu0 %405
        %407 = vadd.xlane.f32.xlu0 %v390
        %v408 = vpop.xlane.xlu0 %407
        %409 = vadd.xlane.f32.xlu0 %v391
        %v410 = vpop.xlane.xlu0 %409
        %411 = vadd.xlane.f32.xlu0 %v392
        %v412 = vpop.xlane.xlu0 %411
        %413 = vadd.xlane.f32.xlu0 %v393
        %v414 = vpop.xlane.xlu0 %413
        %415 = vadd.xlane.f32.xlu0 %v394
        %v416 = vpop.xlane.xlu0 %415
        %417 = vadd.xlane.f32.xlu0 %v395
        %v418 = vpop.xlane.xlu0 %417
        %419 = vadd.xlane.f32.xlu0 %v396
        %v420 = vpop.xlane.xlu0 %419
        %421 = vadd.xlane.f32.xlu0 %v397
        %v422 = vpop.xlane.xlu0 %421
        %423 = vadd.xlane.f32.xlu0 %v398
        %v424 = vpop.xlane.xlu0 %423
        %425 = vadd.xlane.f32.xlu0 %v399
        %v426 = vpop.xlane.xlu0 %425
        %427 = vadd.xlane.f32.xlu0 %v400
        %v428 = vpop.xlane.xlu0 %427
        %429 = vadd.xlane.f32.xlu0 %v401
        %v430 = vpop.xlane.xlu0 %429
        %431 = vadd.xlane.f32.xlu0 %v402
        %v432 = vpop.xlane.xlu0 %431
        %433 = vadd.xlane.f32.xlu0 %v403
        %v434 = vpop.xlane.xlu0 %433
        %435 = vadd.xlane.f32.xlu0 %v404
        %v436 = vpop.xlane.xlu0 %435
        %v437 = vmul.f32 %v406, 0.0078125
        %v438 = vmul.f32 %v408, 0.0078125
        %v439 = vmul.f32 %v410, 0.0078125
        %v440 = vmul.f32 %v412, 0.0078125
        %v441 = vmul.f32 %v414, 0.0078125
        %v442 = vmul.f32 %v416, 0.0078125
        %v443 = vmul.f32 %v418, 0.0078125
        %v444 = vmul.f32 %v420, 0.0078125
        %v445 = vmul.f32 %v422, 0.0078125
        %v446 = vmul.f32 %v424, 0.0078125
        %v447 = vmul.f32 %v426, 0.0078125
        %v448 = vmul.f32 %v428, 0.0078125
        %v449 = vmul.f32 %v430, 0.0078125
        %v450 = vmul.f32 %v432, 0.0078125
        %v451 = vmul.f32 %v434, 0.0078125
        %v452 = vmul.f32 %v436, 0.0078125
        %v453 = vmul.f32 %v373, %v373
        %v454 = vmul.f32 %v374, %v374
        %v455 = vmul.f32 %v375, %v375
        %v456 = vmul.f32 %v376, %v376
        %v457 = vmul.f32 %v377, %v377
        %v458 = vmul.f32 %v378, %v378
        %v459 = vmul.f32 %v379, %v379
        %v460 = vmul.f32 %v380, %v380
        %v461 = vmul.f32 %v381, %v381
        %v462 = vmul.f32 %v382, %v382
        %v463 = vmul.f32 %v383, %v383
        %v464 = vmul.f32 %v384, %v384
        %v465 = vmul.f32 %v385, %v385
        %v466 = vmul.f32 %v386, %v386
        %v467 = vmul.f32 %v387, %v387
        %v468 = vmul.f32 %v388, %v388
        %v469 = vsub.f32 %v437, %v453
        %v470 = vsub.f32 %v438, %v454
        %v471 = vsub.f32 %v439, %v455
        %v472 = vsub.f32 %v440, %v456
        %v473 = vsub.f32 %v441, %v457
        %v474 = vsub.f32 %v442, %v458
        %v475 = vsub.f32 %v443, %v459
        %v476 = vsub.f32 %v444, %v460
        %v477 = vsub.f32 %v445, %v461
        %v478 = vsub.f32 %v446, %v462
        %v479 = vsub.f32 %v447, %v463
        %v480 = vsub.f32 %v448, %v464
        %v481 = vsub.f32 %v449, %v465
        %v482 = vsub.f32 %v450, %v466
        %v483 = vsub.f32 %v451, %v467
        %v484 = vsub.f32 %v452, %v468
        %v485 = vmax.f32 %v469, 0.0
        %v486 = vmax.f32 %v470, 0.0
        %v487 = vmax.f32 %v471, 0.0
        %v488 = vmax.f32 %v472, 0.0
        %v489 = vmax.f32 %v473, 0.0
        %v490 = vmax.f32 %v474, 0.0
        %v491 = vmax.f32 %v475, 0.0
        %v492 = vmax.f32 %v476, 0.0
        %v493 = vmax.f32 %v477, 0.0
        %v494 = vmax.f32 %v478, 0.0
        %v495 = vmax.f32 %v479, 0.0
        %v496 = vmax.f32 %v480, 0.0
        %v497 = vmax.f32 %v481, 0.0
        %v498 = vmax.f32 %v482, 0.0
        %v499 = vmax.f32 %v483, 0.0
        %v500 = vmax.f32 %v484, 0.0
        %v501 = vsub.f32 %v227, %v373
        %v502 = vsub.f32 %v228, %v374
        %v503 = vsub.f32 %v229, %v375
        %v504 = vsub.f32 %v230, %v376
        %v505 = vsub.f32 %v231, %v377
        %v506 = vsub.f32 %v232, %v378
        %v507 = vsub.f32 %v233, %v379
        %v508 = vsub.f32 %v234, %v380
        %v509 = vsub.f32 %v235, %v381
        %v510 = vsub.f32 %v236, %v382
        %v511 = vsub.f32 %v237, %v383
        %v512 = vsub.f32 %v238, %v384
        %v513 = vsub.f32 %v239, %v385
        %v514 = vsub.f32 %v240, %v386
        %v515 = vsub.f32 %v241, %v387
        %v516 = vsub.f32 %v242, %v388
        %v517 = vadd.f32 %v485, 1e-05
        %v518 = vadd.f32 %v486, 1e-05
        %v519 = vadd.f32 %v487, 1e-05
        %v520 = vadd.f32 %v488, 1e-05
        %v521 = vadd.f32 %v489, 1e-05
        %v522 = vadd.f32 %v490, 1e-05
        %v523 = vadd.f32 %v491, 1e-05
        %v524 = vadd.f32 %v492, 1e-05
        %v525 = vadd.f32 %v493, 1e-05
        %v526 = vadd.f32 %v494, 1e-05
        %v527 = vadd.f32 %v495, 1e-05
        %v528 = vadd.f32 %v496, 1e-05
        %v529 = vadd.f32 %v497, 1e-05
        %v530 = vadd.f32 %v498, 1e-05
        %v531 = vadd.f32 %v499, 1e-05
        %v532 = vadd.f32 %v500, 1e-05
        %v533 = vrsqrt.pop %v517
        %v534 = vrsqrt.pop %v518
        %v535 = vrsqrt.pop %v519
        %v536 = vrsqrt.pop %v520
        %v537 = vrsqrt.pop %v521
        %v538 = vrsqrt.pop %v522
        %v539 = vrsqrt.pop %v523
        %v540 = vrsqrt.pop %v524
        %v541 = vrsqrt.pop %v525
        %v542 = vrsqrt.pop %v526
        %v543 = vrsqrt.pop %v527
        %v544 = vrsqrt.pop %v528
        %v545 = vrsqrt.pop %v529
        %v546 = vrsqrt.pop %v530
        %v547 = vrsqrt.pop %v531
        %v548 = vrsqrt.pop %v532
        %v549 = vmul.f32 %v501, %v533
        %v550 = vmul.f32 %v502, %v534
        %v551 = vmul.f32 %v503, %v535
        %v552 = vmul.f32 %v504, %v536
        %v553 = vmul.f32 %v505, %v537
        %v554 = vmul.f32 %v506, %v538
        %v555 = vmul.f32 %v507, %v539
        %v556 = vmul.f32 %v508, %v540
        %v557 = vmul.f32 %v509, %v541
        %v558 = vmul.f32 %v510, %v542
        %v559 = vmul.f32 %v511, %v543
        %v560 = vmul.f32 %v512, %v544
        %v561 = vmul.f32 %v513, %v545
        %v562 = vmul.f32 %v514, %v546
        %v563 = vmul.f32 %v515, %v547
        %v564 = vmul.f32 %v516, %v548
        %v565 = vpack.c.bf16 %v550, %v549
        %v566 = vpack.c.bf16 %v552, %v551
        %v567 = vpack.c.bf16 %v554, %v553
        %v568 = vpack.c.bf16 %v556, %v555
        %v569 = vpack.c.bf16 %v558, %v557
        %v570 = vpack.c.bf16 %v560, %v559
        %v571 = vpack.c.bf16 %v562, %v561
        %v572 = vpack.c.bf16 %v564, %v563
        %v574 = vlaneseq
        %v575 = vshrl.u32 %v574, 7
        %v576 = vsub.s32 0, %v575
        %v577 = vrot.slane %v275, %v576
        %v578 = vlaneseq
        %v579 = vshrl.u32 %v578, 7
        %v580 = vsub.s32 1, %v579
        %v581 = vrot.slane %v275, %v580
        %v582 = vlaneseq
        %v583 = vshrl.u32 %v582, 7
        %v584 = vsub.s32 2, %v583
        %v585 = vrot.slane %v275, %v584
        %v586 = vlaneseq
        %v587 = vshrl.u32 %v586, 7
        %v588 = vsub.s32 3, %v587
        %v589 = vrot.slane %v275, %v588
        %v626 = vunpack.c.l.b16 %v243
        %v627 = vunpack.c.h.b16 %v243
        %v628 = vunpack.c.l.b16 %v244
        %v629 = vunpack.c.h.b16 %v244
        %v630 = vunpack.c.l.b16 %v245
        %v631 = vunpack.c.h.b16 %v245
        %v632 = vunpack.c.l.b16 %v246
        %v633 = vunpack.c.h.b16 %v246
        %v634 = vunpack.c.l.b16 %v247
        %v635 = vunpack.c.h.b16 %v247
        %v636 = vunpack.c.l.b16 %v248
        %v637 = vunpack.c.h.b16 %v248
        %v638 = vunpack.c.l.b16 %v249
        %v639 = vunpack.c.h.b16 %v249
        %v640 = vunpack.c.l.b16 %v250
        %v641 = vunpack.c.h.b16 %v250
        %v642 = vunpack.c.l.b16 %v251
        %v643 = vunpack.c.h.b16 %v251
        %v644 = vunpack.c.l.b16 %v252
        %v645 = vunpack.c.h.b16 %v252
        %v646 = vunpack.c.l.b16 %v253
        %v647 = vunpack.c.h.b16 %v253
        %v648 = vunpack.c.l.b16 %v254
        %v649 = vunpack.c.h.b16 %v254
        %v650 = vunpack.c.l.b16 %v255
        %v651 = vunpack.c.h.b16 %v255
        %v652 = vunpack.c.l.b16 %v256
        %v653 = vunpack.c.h.b16 %v256
        %v654 = vunpack.c.l.b16 %v257
        %v655 = vunpack.c.h.b16 %v257
        %v656 = vunpack.c.l.b16 %v258
        %v657 = vunpack.c.h.b16 %v258
        %v658 = vunpack.c.l.b16 %v259
        %v659 = vunpack.c.h.b16 %v259
        %v660 = vunpack.c.l.b16 %v260
        %v661 = vunpack.c.h.b16 %v260
        %v662 = vunpack.c.l.b16 %v261
        %v663 = vunpack.c.h.b16 %v261
        %v664 = vunpack.c.l.b16 %v262
        %v665 = vunpack.c.h.b16 %v262
        %v666 = vunpack.c.l.b16 %v263
        %v667 = vunpack.c.h.b16 %v263
        %v668 = vunpack.c.l.b16 %v264
        %v669 = vunpack.c.h.b16 %v264
        %v670 = vunpack.c.l.b16 %v265
        %v671 = vunpack.c.h.b16 %v265
        %v672 = vunpack.c.l.b16 %v266
        %v673 = vunpack.c.h.b16 %v266
        %v674 = vunpack.c.l.b16 %v267
        %v675 = vunpack.c.h.b16 %v267
        %v676 = vunpack.c.l.b16 %v268
        %v677 = vunpack.c.h.b16 %v268
        %v678 = vunpack.c.l.b16 %v269
        %v679 = vunpack.c.h.b16 %v269
        %v680 = vunpack.c.l.b16 %v270
        %v681 = vunpack.c.h.b16 %v270
        %v682 = vunpack.c.l.b16 %v271
        %v683 = vunpack.c.h.b16 %v271
        %v684 = vunpack.c.l.b16 %v272
        %v685 = vunpack.c.h.b16 %v272
        %v686 = vunpack.c.l.b16 %v273
        %v687 = vunpack.c.h.b16 %v273
        %v688 = vunpack.c.l.b16 %v274
        %v689 = vunpack.c.h.b16 %v274
        %v690 = vpack.c.b16 %v630, %v626
        %v691 = vpack.c.b16 %v631, %v627
        %v692 = vpack.c.b16 %v632, %v628
        %v693 = vpack.c.b16 %v633, %v629
        %v694 = vpack.c.b16 %v638, %v634
        %v695 = vpack.c.b16 %v639, %v635
        %v696 = vpack.c.b16 %v640, %v636
        %v697 = vpack.c.b16 %v641, %v637
        %v698 = vpack.c.b16 %v646, %v642
        %v699 = vpack.c.b16 %v647, %v643
        %v700 = vpack.c.b16 %v648, %v644
        %v701 = vpack.c.b16 %v649, %v645
        %v702 = vpack.c.b16 %v654, %v650
        %v703 = vpack.c.b16 %v655, %v651
        %v704 = vpack.c.b16 %v656, %v652
        %v705 = vpack.c.b16 %v657, %v653
        %v706 = vpack.c.b16 %v662, %v658
        %v707 = vpack.c.b16 %v663, %v659
        %v708 = vpack.c.b16 %v664, %v660
        %v709 = vpack.c.b16 %v665, %v661
        %v710 = vpack.c.b16 %v670, %v666
        %v711 = vpack.c.b16 %v671, %v667
        %v712 = vpack.c.b16 %v672, %v668
        %v713 = vpack.c.b16 %v673, %v669
        %v714 = vpack.c.b16 %v678, %v674
        %v715 = vpack.c.b16 %v679, %v675
        %v716 = vpack.c.b16 %v680, %v676
        %v717 = vpack.c.b16 %v681, %v677
        %v718 = vpack.c.b16 %v686, %v682
        %v719 = vpack.c.b16 %v687, %v683
        %v720 = vpack.c.b16 %v688, %v684
        %v721 = vpack.c.b16 %v689, %v685
        %754 = vmatprep.subr.bf16.mxu0 %v719
        %755 = vmatpush1.bf16.msra.mxu0 %v718
        %756 = vmatprep.subr.bf16.mxu0 %v715
        %757 = vmatpush1.bf16.msra.mxu0 %v714
        %758 = vmatprep.subr.bf16.mxu0 %v711
        %759 = vmatpush1.bf16.msra.mxu0 %v710
        %760 = vmatprep.subr.bf16.mxu0 %v707
        %761 = vmatpush1.bf16.msra.mxu0 %v706
        %762 = vmatprep.subr.bf16.mxu0 %v703
        %763 = vmatpush1.bf16.msra.mxu0 %v702
        %764 = vmatprep.subr.bf16.mxu0 %v699
        %765 = vmatpush1.bf16.msra.mxu0 %v698
        %766 = vmatprep.subr.bf16.mxu0 %v695
        %767 = vmatpush1.bf16.msra.mxu0 %v694
        %768 = vmatprep.subr.bf16.mxu0 %v691
        %769 = vmatpush1.bf16.msra.mxu0 %v690
        %770 = vmatprep.subr.bf16.mxu0 0
        %771 = vmatpush2.bf16.msra.mxu0 0
        %772 = vmatprep.subr.bf16.mxu0 0
        %773 = vmatpush2.bf16.msra.mxu0 0
        %774 = vmatprep.subr.bf16.mxu0 0
        %775 = vmatpush2.bf16.msra.mxu0 0
        %776 = vmatprep.subr.bf16.mxu0 0
        %777 = vmatpush2.bf16.msra.mxu0 0
        %778 = vmatprep.subr.bf16.mxu0 0
        %779 = vmatpush2.bf16.msra.mxu0 0
        %780 = vmatprep.subr.bf16.mxu0 0
        %781 = vmatpush2.bf16.msra.mxu0 0
        %782 = vmatprep.subr.bf16.mxu0 0
        %783 = vmatpush2.bf16.msra.mxu0 0
        %784 = vmatprep.subr.bf16.mxu0 0
        %785 = vmatpush2.bf16.msra.mxu0 0
        %786 = vmatprep.mubr.bf16.mxu0 0
        %787 = vmatmul.mubr.bf16.gmra.mxu0 %v565
        %v788 = vpop.f32.mrf.mxu0
        %v789 = vadd.f32 %v577, %v788
        %v790 = vpop.f32.mrf.mxu0
        %v791 = vadd.f32 %v581, %v790
        %v792 = vpop.f32.mrf.mxu0
        %v793 = vadd.f32 %v577, %v792
        %v794 = vpop.f32.mrf.mxu0
        %v795 = vadd.f32 %v581, %v794
        %796 = vmatprep.mubr.bf16.mxu0 0
        %797 = vmatmul.mubr.bf16.gmra.mxu0 %v566
        %v798 = vpop.f32.mrf.mxu0
        %v799 = vadd.f32 %v577, %v798
        %v800 = vpop.f32.mrf.mxu0
        %v801 = vadd.f32 %v581, %v800
        %v802 = vpop.f32.mrf.mxu0
        %v803 = vadd.f32 %v577, %v802
        %v804 = vpop.f32.mrf.mxu0
        %v805 = vadd.f32 %v581, %v804
        %806 = vmatprep.mubr.bf16.mxu0 0
        %807 = vmatmul.mubr.bf16.gmra.mxu0 %v567
        %v808 = vpop.f32.mrf.mxu0
        %v809 = vadd.f32 %v577, %v808
        %v810 = vpop.f32.mrf.mxu0
        %v811 = vadd.f32 %v581, %v810
        %v812 = vpop.f32.mrf.mxu0
        %v813 = vadd.f32 %v577, %v812
        %v814 = vpop.f32.mrf.mxu0
        %v815 = vadd.f32 %v581, %v814
        %816 = vmatprep.mubr.bf16.mxu0 0
        %817 = vmatmul.mubr.bf16.gmra.mxu0 %v568
        %v818 = vpop.f32.mrf.mxu0
        %v819 = vadd.f32 %v577, %v818
        %v820 = vpop.f32.mrf.mxu0
        %v821 = vadd.f32 %v581, %v820
        %v822 = vpop.f32.mrf.mxu0
        %v823 = vadd.f32 %v577, %v822
        %v824 = vpop.f32.mrf.mxu0
        %v825 = vadd.f32 %v581, %v824
        %826 = vmatprep.mubr.bf16.mxu0 0
        %827 = vmatmul.mubr.bf16.gmra.mxu0 %v569
        %v828 = vpop.f32.mrf.mxu0
        %v829 = vadd.f32 %v577, %v828
        %v830 = vpop.f32.mrf.mxu0
        %v831 = vadd.f32 %v581, %v830
        %v832 = vpop.f32.mrf.mxu0
        %v833 = vadd.f32 %v577, %v832
        %v834 = vpop.f32.mrf.mxu0
        %v835 = vadd.f32 %v581, %v834
        %836 = vmatprep.mubr.bf16.mxu0 0
        %837 = vmatmul.mubr.bf16.gmra.mxu0 %v570
        %v838 = vpop.f32.mrf.mxu0
        %v839 = vadd.f32 %v577, %v838
        %v840 = vpop.f32.mrf.mxu0
        %v841 = vadd.f32 %v581, %v840
        %v842 = vpop.f32.mrf.mxu0
        %v843 = vadd.f32 %v577, %v842
        %v844 = vpop.f32.mrf.mxu0
        %v845 = vadd.f32 %v581, %v844
        %846 = vmatprep.mubr.bf16.mxu0 0
        %847 = vmatmul.mubr.bf16.gmra.mxu0 %v571
        %v848 = vpop.f32.mrf.mxu0
        %v849 = vadd.f32 %v577, %v848
        %v850 = vpop.f32.mrf.mxu0
        %v851 = vadd.f32 %v581, %v850
        %v852 = vpop.f32.mrf.mxu0
        %v853 = vadd.f32 %v577, %v852
        %v854 = vpop.f32.mrf.mxu0
        %v855 = vadd.f32 %v581, %v854
        %856 = vmatprep.mubr.bf16.mxu0 0
        %857 = vmatmul.mubr.bf16.gmra.mxu0 %v572
        %v858 = vpop.f32.mrf.mxu0
        %v859 = vadd.f32 %v577, %v858
        %v860 = vpop.f32.mrf.mxu0
        %v861 = vadd.f32 %v581, %v860
        %v862 = vpop.f32.mrf.mxu0
        %v863 = vadd.f32 %v577, %v862
        %v864 = vpop.f32.mrf.mxu0
        %v865 = vadd.f32 %v581, %v864
        %866 = vdwg.mxu0
        %867 = vmatprep.subr.bf16.mxu0 %v721
        %868 = vmatpush1.bf16.msra.mxu0 %v720
        %869 = vmatprep.subr.bf16.mxu0 %v717
        %870 = vmatpush1.bf16.msra.mxu0 %v716
        %871 = vmatprep.subr.bf16.mxu0 %v713
        %872 = vmatpush1.bf16.msra.mxu0 %v712
        %873 = vmatprep.subr.bf16.mxu0 %v709
        %874 = vmatpush1.bf16.msra.mxu0 %v708
        %875 = vmatprep.subr.bf16.mxu0 %v705
        %876 = vmatpush1.bf16.msra.mxu0 %v704
        %877 = vmatprep.subr.bf16.mxu0 %v701
        %878 = vmatpush1.bf16.msra.mxu0 %v700
        %879 = vmatprep.subr.bf16.mxu0 %v697
        %880 = vmatpush1.bf16.msra.mxu0 %v696
        %881 = vmatprep.subr.bf16.mxu0 %v693
        %882 = vmatpush1.bf16.msra.mxu0 %v692
        %883 = vmatprep.subr.bf16.mxu0 0
        %884 = vmatpush2.bf16.msra.mxu0 0
        %885 = vmatprep.subr.bf16.mxu0 0
        %886 = vmatpush2.bf16.msra.mxu0 0
        %887 = vmatprep.subr.bf16.mxu0 0
        %888 = vmatpush2.bf16.msra.mxu0 0
        %889 = vmatprep.subr.bf16.mxu0 0
        %890 = vmatpush2.bf16.msra.mxu0 0
        %891 = vmatprep.subr.bf16.mxu0 0
        %892 = vmatpush2.bf16.msra.mxu0 0
        %893 = vmatprep.subr.bf16.mxu0 0
        %894 = vmatpush2.bf16.msra.mxu0 0
        %895 = vmatprep.subr.bf16.mxu0 0
        %896 = vmatpush2.bf16.msra.mxu0 0
        %897 = vmatprep.subr.bf16.mxu0 0
        %898 = vmatpush2.bf16.msra.mxu0 0
        %899 = vmatprep.mubr.bf16.mxu0 0
        %900 = vmatmul.mubr.bf16.gmra.mxu0 %v565
        %v901 = vpop.f32.mrf.mxu0
        %v902 = vadd.f32 %v585, %v901
        %v903 = vpop.f32.mrf.mxu0
        %v904 = vadd.f32 %v589, %v903
        %v905 = vpop.f32.mrf.mxu0
        %v906 = vadd.f32 %v585, %v905
        %v907 = vpop.f32.mrf.mxu0
        %v908 = vadd.f32 %v589, %v907
        %909 = vmatprep.mubr.bf16.mxu0 0
        %910 = vmatmul.mubr.bf16.gmra.mxu0 %v566
        %v911 = vpop.f32.mrf.mxu0
        %v912 = vadd.f32 %v585, %v911
        %v913 = vpop.f32.mrf.mxu0
        %v914 = vadd.f32 %v589, %v913
        %v915 = vpop.f32.mrf.mxu0
        %v916 = vadd.f32 %v585, %v915
        %v917 = vpop.f32.mrf.mxu0
        %v918 = vadd.f32 %v589, %v917
        %919 = vmatprep.mubr.bf16.mxu0 0
        %920 = vmatmul.mubr.bf16.gmra.mxu0 %v567
        %v921 = vpop.f32.mrf.mxu0
        %v922 = vadd.f32 %v585, %v921
        %v923 = vpop.f32.mrf.mxu0
        %v924 = vadd.f32 %v589, %v923
        %v925 = vpop.f32.mrf.mxu0
        %v926 = vadd.f32 %v585, %v925
        %v927 = vpop.f32.mrf.mxu0
        %v928 = vadd.f32 %v589, %v927
        %929 = vmatprep.mubr.bf16.mxu0 0
        %930 = vmatmul.mubr.bf16.gmra.mxu0 %v568
        %v931 = vpop.f32.mrf.mxu0
        %v932 = vadd.f32 %v585, %v931
        %v933 = vpop.f32.mrf.mxu0
        %v934 = vadd.f32 %v589, %v933
        %v935 = vpop.f32.mrf.mxu0
        %v936 = vadd.f32 %v585, %v935
        %v937 = vpop.f32.mrf.mxu0
        %v938 = vadd.f32 %v589, %v937
        %939 = vmatprep.mubr.bf16.mxu0 0
        %940 = vmatmul.mubr.bf16.gmra.mxu0 %v569
        %v941 = vpop.f32.mrf.mxu0
        %v942 = vadd.f32 %v585, %v941
        %v943 = vpop.f32.mrf.mxu0
        %v944 = vadd.f32 %v589, %v943
        %v945 = vpop.f32.mrf.mxu0
        %v946 = vadd.f32 %v585, %v945
        %v947 = vpop.f32.mrf.mxu0
        %v948 = vadd.f32 %v589, %v947
        %949 = vmatprep.mubr.bf16.mxu0 0
        %950 = vmatmul.mubr.bf16.gmra.mxu0 %v570
        %v951 = vpop.f32.mrf.mxu0
        %v952 = vadd.f32 %v585, %v951
        %v953 = vpop.f32.mrf.mxu0
        %v954 = vadd.f32 %v589, %v953
        %v955 = vpop.f32.mrf.mxu0
        %v956 = vadd.f32 %v585, %v955
        %v957 = vpop.f32.mrf.mxu0
        %v958 = vadd.f32 %v589, %v957
        %959 = vmatprep.mubr.bf16.mxu0 0
        %960 = vmatmul.mubr.bf16.gmra.mxu0 %v571
        %v961 = vpop.f32.mrf.mxu0
        %v962 = vadd.f32 %v585, %v961
        %v963 = vpop.f32.mrf.mxu0
        %v964 = vadd.f32 %v589, %v963
        %v965 = vpop.f32.mrf.mxu0
        %v966 = vadd.f32 %v585, %v965
        %v967 = vpop.f32.mrf.mxu0
        %v968 = vadd.f32 %v589, %v967
        %969 = vmatprep.mubr.bf16.mxu0 0
        %970 = vmatmul.mubr.bf16.gmra.mxu0 %v572
        %v971 = vpop.f32.mrf.mxu0
        %v972 = vadd.f32 %v585, %v971
        %v973 = vpop.f32.mrf.mxu0
        %v974 = vadd.f32 %v589, %v973
        %v975 = vpop.f32.mrf.mxu0
        %v976 = vadd.f32 %v585, %v975
        %v977 = vpop.f32.mrf.mxu0
        %v978 = vadd.f32 %v589, %v977
        %979 = vdwg.mxu0
        %v980 = vmul.f32 %v789, %v789
        %v981 = vmul.f32 %v791, %v791
        %v982 = vmul.f32 %v902, %v902
        %v983 = vmul.f32 %v904, %v904
        %v984 = vmul.f32 %v793, %v793
        %v985 = vmul.f32 %v795, %v795
        %v986 = vmul.f32 %v906, %v906
        %v987 = vmul.f32 %v908, %v908
        %v988 = vmul.f32 %v799, %v799
        %v989 = vmul.f32 %v801, %v801
        %v990 = vmul.f32 %v912, %v912
        %v991 = vmul.f32 %v914, %v914
        %v992 = vmul.f32 %v803, %v803
        %v993 = vmul.f32 %v805, %v805
        %v994 = vmul.f32 %v916, %v916
        %v995 = vmul.f32 %v918, %v918
        %v996 = vmul.f32 %v809, %v809
        %v997 = vmul.f32 %v811, %v811
        %v998 = vmul.f32 %v922, %v922
        %v999 = vmul.f32 %v924, %v924
        %v1000 = vmul.f32 %v813, %v813
        %v1001 = vmul.f32 %v815, %v815
        %v1002 = vmul.f32 %v926, %v926
        %v1003 = vmul.f32 %v928, %v928
        %v1004 = vmul.f32 %v819, %v819
        %v1005 = vmul.f32 %v821, %v821
        %v1006 = vmul.f32 %v932, %v932
        %v1007 = vmul.f32 %v934, %v934
        %v1008 = vmul.f32 %v823, %v823
        %v1009 = vmul.f32 %v825, %v825
        %v1010 = vmul.f32 %v936, %v936
        %v1011 = vmul.f32 %v938, %v938
        %v1012 = vmul.f32 %v829, %v829
        %v1013 = vmul.f32 %v831, %v831
        %v1014 = vmul.f32 %v942, %v942
        %v1015 = vmul.f32 %v944, %v944
        %v1016 = vmul.f32 %v833, %v833
        %v1017 = vmul.f32 %v835, %v835
        %v1018 = vmul.f32 %v946, %v946
        %v1019 = vmul.f32 %v948, %v948
        %v1020 = vmul.f32 %v839, %v839
        %v1021 = vmul.f32 %v841, %v841
        %v1022 = vmul.f32 %v952, %v952
        %v1023 = vmul.f32 %v954, %v954
        %v1024 = vmul.f32 %v843, %v843
        %v1025 = vmul.f32 %v845, %v845
        %v1026 = vmul.f32 %v956, %v956
        %v1027 = vmul.f32 %v958, %v958
        %v1028 = vmul.f32 %v849, %v849
        %v1029 = vmul.f32 %v851, %v851
        %v1030 = vmul.f32 %v962, %v962
        %v1031 = vmul.f32 %v964, %v964
        %v1032 = vmul.f32 %v853, %v853
        %v1033 = vmul.f32 %v855, %v855
        %v1034 = vmul.f32 %v966, %v966
        %v1035 = vmul.f32 %v968, %v968
        %v1036 = vmul.f32 %v859, %v859
        %v1037 = vmul.f32 %v861, %v861
        %v1038 = vmul.f32 %v972, %v972
        %v1039 = vmul.f32 %v974, %v974
        %v1040 = vmul.f32 %v863, %v863
        %v1041 = vmul.f32 %v865, %v865
        %v1042 = vmul.f32 %v976, %v976
        %v1043 = vmul.f32 %v978, %v978
        %v1044 = vmul.f32 %v789, %v980
        %v1045 = vmul.f32 %v791, %v981
        %v1046 = vmul.f32 %v902, %v982
        %v1047 = vmul.f32 %v904, %v983
        %v1048 = vmul.f32 %v793, %v984
        %v1049 = vmul.f32 %v795, %v985
        %v1050 = vmul.f32 %v906, %v986
        %v1051 = vmul.f32 %v908, %v987
        %v1052 = vmul.f32 %v799, %v988
        %v1053 = vmul.f32 %v801, %v989
        %v1054 = vmul.f32 %v912, %v990
        %v1055 = vmul.f32 %v914, %v991
        %v1056 = vmul.f32 %v803, %v992
        %v1057 = vmul.f32 %v805, %v993
        %v1058 = vmul.f32 %v916, %v994
        %v1059 = vmul.f32 %v918, %v995
        %v1060 = vmul.f32 %v809, %v996
        %v1061 = vmul.f32 %v811, %v997
        %v1062 = vmul.f32 %v922, %v998
        %v1063 = vmul.f32 %v924, %v999
        %v1064 = vmul.f32 %v813, %v1000
        %v1065 = vmul.f32 %v815, %v1001
        %v1066 = vmul.f32 %v926, %v1002
        %v1067 = vmul.f32 %v928, %v1003
        %v1068 = vmul.f32 %v819, %v1004
        %v1069 = vmul.f32 %v821, %v1005
        %v1070 = vmul.f32 %v932, %v1006
        %v1071 = vmul.f32 %v934, %v1007
        %v1072 = vmul.f32 %v823, %v1008
        %v1073 = vmul.f32 %v825, %v1009
        %v1074 = vmul.f32 %v936, %v1010
        %v1075 = vmul.f32 %v938, %v1011
        %v1076 = vmul.f32 %v829, %v1012
        %v1077 = vmul.f32 %v831, %v1013
        %v1078 = vmul.f32 %v942, %v1014
        %v1079 = vmul.f32 %v944, %v1015
        %v1080 = vmul.f32 %v833, %v1016
        %v1081 = vmul.f32 %v835, %v1017
        %v1082 = vmul.f32 %v946, %v1018
        %v1083 = vmul.f32 %v948, %v1019
        %v1084 = vmul.f32 %v839, %v1020
        %v1085 = vmul.f32 %v841, %v1021
        %v1086 = vmul.f32 %v952, %v1022
        %v1087 = vmul.f32 %v954, %v1023
        %v1088 = vmul.f32 %v843, %v1024
        %v1089 = vmul.f32 %v845, %v1025
        %v1090 = vmul.f32 %v956, %v1026
        %v1091 = vmul.f32 %v958, %v1027
        %v1092 = vmul.f32 %v849, %v1028
        %v1093 = vmul.f32 %v851, %v1029
        %v1094 = vmul.f32 %v962, %v1030
        %v1095 = vmul.f32 %v964, %v1031
        %v1096 = vmul.f32 %v853, %v1032
        %v1097 = vmul.f32 %v855, %v1033
        %v1098 = vmul.f32 %v966, %v1034
        %v1099 = vmul.f32 %v968, %v1035
        %v1100 = vmul.f32 %v859, %v1036
        %v1101 = vmul.f32 %v861, %v1037
        %v1102 = vmul.f32 %v972, %v1038
        %v1103 = vmul.f32 %v974, %v1039
        %v1104 = vmul.f32 %v863, %v1040
        %v1105 = vmul.f32 %v865, %v1041
        %v1106 = vmul.f32 %v976, %v1042
        %v1107 = vmul.f32 %v978, %v1043
        %v1108 = vmul.f32 %v1044, 0.044715
        %v1109 = vmul.f32 %v1045, 0.044715
        %v1110 = vmul.f32 %v1046, 0.044715
        %v1111 = vmul.f32 %v1047, 0.044715
        %v1112 = vmul.f32 %v1048, 0.044715
        %v1113 = vmul.f32 %v1049, 0.044715
        %v1114 = vmul.f32 %v1050, 0.044715
        %v1115 = vmul.f32 %v1051, 0.044715
        %v1116 = vmul.f32 %v1052, 0.044715
        %v1117 = vmul.f32 %v1053, 0.044715
        %v1118 = vmul.f32 %v1054, 0.044715
        %v1119 = vmul.f32 %v1055, 0.044715
        %v1120 = vmul.f32 %v1056, 0.044715
        %v1121 = vmul.f32 %v1057, 0.044715
        %v1122 = vmul.f32 %v1058, 0.044715
        %v1123 = vmul.f32 %v1059, 0.044715
        %v1124 = vmul.f32 %v1060, 0.044715
        %v1125 = vmul.f32 %v1061, 0.044715
        %v1126 = vmul.f32 %v1062, 0.044715
        %v1127 = vmul.f32 %v1063, 0.044715
        %v1128 = vmul.f32 %v1064, 0.044715
        %v1129 = vmul.f32 %v1065, 0.044715
        %v1130 = vmul.f32 %v1066, 0.044715
        %v1131 = vmul.f32 %v1067, 0.044715
        %v1132 = vmul.f32 %v1068, 0.044715
        %v1133 = vmul.f32 %v1069, 0.044715
        %v1134 = vmul.f32 %v1070, 0.044715
        %v1135 = vmul.f32 %v1071, 0.044715
        %v1136 = vmul.f32 %v1072, 0.044715
        %v1137 = vmul.f32 %v1073, 0.044715
        %v1138 = vmul.f32 %v1074, 0.044715
        %v1139 = vmul.f32 %v1075, 0.044715
        %v1140 = vmul.f32 %v1076, 0.044715
        %v1141 = vmul.f32 %v1077, 0.044715
        %v1142 = vmul.f32 %v1078, 0.044715
        %v1143 = vmul.f32 %v1079, 0.044715
        %v1144 = vmul.f32 %v1080, 0.044715
        %v1145 = vmul.f32 %v1081, 0.044715
        %v1146 = vmul.f32 %v1082, 0.044715
        %v1147 = vmul.f32 %v1083, 0.044715
        %v1148 = vmul.f32 %v1084, 0.044715
        %v1149 = vmul.f32 %v1085, 0.044715
        %v1150 = vmul.f32 %v1086, 0.044715
        %v1151 = vmul.f32 %v1087, 0.044715
        %v1152 = vmul.f32 %v1088, 0.044715
        %v1153 = vmul.f32 %v1089, 0.044715
        %v1154 = vmul.f32 %v1090, 0.044715
        %v1155 = vmul.f32 %v1091, 0.044715
        %v1156 = vmul.f32 %v1092, 0.044715
        %v1157 = vmul.f32 %v1093, 0.044715
        %v1158 = vmul.f32 %v1094, 0.044715
        %v1159 = vmul.f32 %v1095, 0.044715
        %v1160 = vmul.f32 %v1096, 0.044715
        %v1161 = vmul.f32 %v1097, 0.044715
        %v1162 = vmul.f32 %v1098, 0.044715
        %v1163 = vmul.f32 %v1099, 0.044715
        %v1164 = vmul.f32 %v1100, 0.044715
        %v1165 = vmul.f32 %v1101, 0.044715
        %v1166 = vmul.f32 %v1102, 0.044715
        %v1167 = vmul.f32 %v1103, 0.044715
        %v1168 = vmul.f32 %v1104, 0.044715
        %v1169 = vmul.f32 %v1105, 0.044715
        %v1170 = vmul.f32 %v1106, 0.044715
        %v1171 = vmul.f32 %v1107, 0.044715
        %v1172 = vadd.f32 %v789, %v1108
        %v1173 = vadd.f32 %v791, %v1109
        %v1174 = vadd.f32 %v902, %v1110
        %v1175 = vadd.f32 %v904, %v1111
        %v1176 = vadd.f32 %v793, %v1112
        %v1177 = vadd.f32 %v795, %v1113
        %v1178 = vadd.f32 %v906, %v1114
        %v1179 = vadd.f32 %v908, %v1115
        %v1180 = vadd.f32 %v799, %v1116
        %v1181 = vadd.f32 %v801, %v1117
        %v1182 = vadd.f32 %v912, %v1118
        %v1183 = vadd.f32 %v914, %v1119
        %v1184 = vadd.f32 %v803, %v1120
        %v1185 = vadd.f32 %v805, %v1121
        %v1186 = vadd.f32 %v916, %v1122
        %v1187 = vadd.f32 %v918, %v1123
        %v1188 = vadd.f32 %v809, %v1124
        %v1189 = vadd.f32 %v811, %v1125
        %v1190 = vadd.f32 %v922, %v1126
        %v1191 = vadd.f32 %v924, %v1127
        %v1192 = vadd.f32 %v813, %v1128
        %v1193 = vadd.f32 %v815, %v1129
        %v1194 = vadd.f32 %v926, %v1130
        %v1195 = vadd.f32 %v928, %v1131
        %v1196 = vadd.f32 %v819, %v1132
        %v1197 = vadd.f32 %v821, %v1133
        %v1198 = vadd.f32 %v932, %v1134
        %v1199 = vadd.f32 %v934, %v1135
        %v1200 = vadd.f32 %v823, %v1136
        %v1201 = vadd.f32 %v825, %v1137
        %v1202 = vadd.f32 %v936, %v1138
        %v1203 = vadd.f32 %v938, %v1139
        %v1204 = vadd.f32 %v829, %v1140
        %v1205 = vadd.f32 %v831, %v1141
        %v1206 = vadd.f32 %v942, %v1142
        %v1207 = vadd.f32 %v944, %v1143
        %v1208 = vadd.f32 %v833, %v1144
        %v1209 = vadd.f32 %v835, %v1145
        %v1210 = vadd.f32 %v946, %v1146
        %v1211 = vadd.f32 %v948, %v1147
        %v1212 = vadd.f32 %v839, %v1148
        %v1213 = vadd.f32 %v841, %v1149
        %v1214 = vadd.f32 %v952, %v1150
        %v1215 = vadd.f32 %v954, %v1151
        %v1216 = vadd.f32 %v843, %v1152
        %v1217 = vadd.f32 %v845, %v1153
        %v1218 = vadd.f32 %v956, %v1154
        %v1219 = vadd.f32 %v958, %v1155
        %v1220 = vadd.f32 %v849, %v1156
        %v1221 = vadd.f32 %v851, %v1157
        %v1222 = vadd.f32 %v962, %v1158
        %v1223 = vadd.f32 %v964, %v1159
        %v1224 = vadd.f32 %v853, %v1160
        %v1225 = vadd.f32 %v855, %v1161
        %v1226 = vadd.f32 %v966, %v1162
        %v1227 = vadd.f32 %v968, %v1163
        %v1228 = vadd.f32 %v859, %v1164
        %v1229 = vadd.f32 %v861, %v1165
        %v1230 = vadd.f32 %v972, %v1166
        %v1231 = vadd.f32 %v974, %v1167
        %v1232 = vadd.f32 %v863, %v1168
        %v1233 = vadd.f32 %v865, %v1169
        %v1234 = vadd.f32 %v976, %v1170
        %v1235 = vadd.f32 %v978, %v1171
        %v1236 = vmul.f32 %v1172, 0.7978846
        %v1237 = vmul.f32 %v1173, 0.7978846
        %v1238 = vmul.f32 %v1174, 0.7978846
        %v1239 = vmul.f32 %v1175, 0.7978846
        %v1240 = vmul.f32 %v1176, 0.7978846
        %v1241 = vmul.f32 %v1177, 0.7978846
        %v1242 = vmul.f32 %v1178, 0.7978846
        %v1243 = vmul.f32 %v1179, 0.7978846
        %v1244 = vmul.f32 %v1180, 0.7978846
        %v1245 = vmul.f32 %v1181, 0.7978846
        %v1246 = vmul.f32 %v1182, 0.7978846
        %v1247 = vmul.f32 %v1183, 0.7978846
        %v1248 = vmul.f32 %v1184, 0.7978846
        %v1249 = vmul.f32 %v1185, 0.7978846
        %v1250 = vmul.f32 %v1186, 0.7978846
        %v1251 = vmul.f32 %v1187, 0.7978846
        %v1252 = vmul.f32 %v1188, 0.7978846
        %v1253 = vmul.f32 %v1189, 0.7978846
        %v1254 = vmul.f32 %v1190, 0.7978846
        %v1255 = vmul.f32 %v1191, 0.7978846
        %v1256 = vmul.f32 %v1192, 0.7978846
        %v1257 = vmul.f32 %v1193, 0.7978846
        %v1258 = vmul.f32 %v1194, 0.7978846
        %v1259 = vmul.f32 %v1195, 0.7978846
        %v1260 = vmul.f32 %v1196, 0.7978846
        %v1261 = vmul.f32 %v1197, 0.7978846
        %v1262 = vmul.f32 %v1198, 0.7978846
        %v1263 = vmul.f32 %v1199, 0.7978846
        %v1264 = vmul.f32 %v1200, 0.7978846
        %v1265 = vmul.f32 %v1201, 0.7978846
        %v1266 = vmul.f32 %v1202, 0.7978846
        %v1267 = vmul.f32 %v1203, 0.7978846
        %v1268 = vmul.f32 %v1204, 0.7978846
        %v1269 = vmul.f32 %v1205, 0.7978846
        %v1270 = vmul.f32 %v1206, 0.7978846
        %v1271 = vmul.f32 %v1207, 0.7978846
        %v1272 = vmul.f32 %v1208, 0.7978846
        %v1273 = vmul.f32 %v1209, 0.7978846
        %v1274 = vmul.f32 %v1210, 0.7978846
        %v1275 = vmul.f32 %v1211, 0.7978846
        %v1276 = vmul.f32 %v1212, 0.7978846
        %v1277 = vmul.f32 %v1213, 0.7978846
        %v1278 = vmul.f32 %v1214, 0.7978846
        %v1279 = vmul.f32 %v1215, 0.7978846
        %v1280 = vmul.f32 %v1216, 0.7978846
        %v1281 = vmul.f32 %v1217, 0.7978846
        %v1282 = vmul.f32 %v1218, 0.7978846
        %v1283 = vmul.f32 %v1219, 0.7978846
        %v1284 = vmul.f32 %v1220, 0.7978846
        %v1285 = vmul.f32 %v1221, 0.7978846
        %v1286 = vmul.f32 %v1222, 0.7978846
        %v1287 = vmul.f32 %v1223, 0.7978846
        %v1288 = vmul.f32 %v1224, 0.7978846
        %v1289 = vmul.f32 %v1225, 0.7978846
        %v1290 = vmul.f32 %v1226, 0.7978846
        %v1291 = vmul.f32 %v1227, 0.7978846
        %v1292 = vmul.f32 %v1228, 0.7978846
        %v1293 = vmul.f32 %v1229, 0.7978846
        %v1294 = vmul.f32 %v1230, 0.7978846
        %v1295 = vmul.f32 %v1231, 0.7978846
        %v1296 = vmul.f32 %v1232, 0.7978846
        %v1297 = vmul.f32 %v1233, 0.7978846
        %v1298 = vmul.f32 %v1234, 0.7978846
        %v1299 = vmul.f32 %v1235, 0.7978846
        %v1300 = vtanh.pop %v1236
        %v1301 = vtanh.pop %v1237
        %v1302 = vtanh.pop %v1238
        %v1303 = vtanh.pop %v1239
        %v1304 = vtanh.pop %v1240
        %v1305 = vtanh.pop %v1241
        %v1306 = vtanh.pop %v1242
        %v1307 = vtanh.pop %v1243
        %v1308 = vtanh.pop %v1244
        %v1309 = vtanh.pop %v1245
        %v1310 = vtanh.pop %v1246
        %v1311 = vtanh.pop %v1247
        %v1312 = vtanh.pop %v1248
        %v1313 = vtanh.pop %v1249
        %v1314 = vtanh.pop %v1250
        %v1315 = vtanh.pop %v1251
        %v1316 = vtanh.pop %v1252
        %v1317 = vtanh.pop %v1253
        %v1318 = vtanh.pop %v1254
        %v1319 = vtanh.pop %v1255
        %v1320 = vtanh.pop %v1256
        %v1321 = vtanh.pop %v1257
        %v1322 = vtanh.pop %v1258
        %v1323 = vtanh.pop %v1259
        %v1324 = vtanh.pop %v1260
        %v1325 = vtanh.pop %v1261
        %v1326 = vtanh.pop %v1262
        %v1327 = vtanh.pop %v1263
        %v1328 = vtanh.pop %v1264
        %v1329 = vtanh.pop %v1265
        %v1330 = vtanh.pop %v1266
        %v1331 = vtanh.pop %v1267
        %v1332 = vtanh.pop %v1268
        %v1333 = vtanh.pop %v1269
        %v1334 = vtanh.pop %v1270
        %v1335 = vtanh.pop %v1271
        %v1336 = vtanh.pop %v1272
        %v1337 = vtanh.pop %v1273
        %v1338 = vtanh.pop %v1274
        %v1339 = vtanh.pop %v1275
        %v1340 = vtanh.pop %v1276
        %v1341 = vtanh.pop %v1277
        %v1342 = vtanh.pop %v1278
        %v1343 = vtanh.pop %v1279
        %v1344 = vtanh.pop %v1280
        %v1345 = vtanh.pop %v1281
        %v1346 = vtanh.pop %v1282
        %v1347 = vtanh.pop %v1283
        %v1348 = vtanh.pop %v1284
        %v1349 = vtanh.pop %v1285
        %v1350 = vtanh.pop %v1286
        %v1351 = vtanh.pop %v1287
        %v1352 = vtanh.pop %v1288
        %v1353 = vtanh.pop %v1289
        %v1354 = vtanh.pop %v1290
        %v1355 = vtanh.pop %v1291
        %v1356 = vtanh.pop %v1292
        %v1357 = vtanh.pop %v1293
        %v1358 = vtanh.pop %v1294
        %v1359 = vtanh.pop %v1295
        %v1360 = vtanh.pop %v1296
        %v1361 = vtanh.pop %v1297
        %v1362 = vtanh.pop %v1298
        %v1363 = vtanh.pop %v1299
        %v1364 = vadd.f32 %v1300, 1.0
        %v1365 = vadd.f32 %v1301, 1.0
        %v1366 = vadd.f32 %v1302, 1.0
        %v1367 = vadd.f32 %v1303, 1.0
        %v1368 = vadd.f32 %v1304, 1.0
        %v1369 = vadd.f32 %v1305, 1.0
        %v1370 = vadd.f32 %v1306, 1.0
        %v1371 = vadd.f32 %v1307, 1.0
        %v1372 = vadd.f32 %v1308, 1.0
        %v1373 = vadd.f32 %v1309, 1.0
        %v1374 = vadd.f32 %v1310, 1.0
        %v1375 = vadd.f32 %v1311, 1.0
        %v1376 = vadd.f32 %v1312, 1.0
        %v1377 = vadd.f32 %v1313, 1.0
        %v1378 = vadd.f32 %v1314, 1.0
        %v1379 = vadd.f32 %v1315, 1.0
        %v1380 = vadd.f32 %v1316, 1.0
        %v1381 = vadd.f32 %v1317, 1.0
        %v1382 = vadd.f32 %v1318, 1.0
        %v1383 = vadd.f32 %v1319, 1.0
        %v1384 = vadd.f32 %v1320, 1.0
        %v1385 = vadd.f32 %v1321, 1.0
        %v1386 = vadd.f32 %v1322, 1.0
        %v1387 = vadd.f32 %v1323, 1.0
        %v1388 = vadd.f32 %v1324, 1.0
        %v1389 = vadd.f32 %v1325, 1.0
        %v1390 = vadd.f32 %v1326, 1.0
        %v1391 = vadd.f32 %v1327, 1.0
        %v1392 = vadd.f32 %v1328, 1.0
        %v1393 = vadd.f32 %v1329, 1.0
        %v1394 = vadd.f32 %v1330, 1.0
        %v1395 = vadd.f32 %v1331, 1.0
        %v1396 = vadd.f32 %v1332, 1.0
        %v1397 = vadd.f32 %v1333, 1.0
        %v1398 = vadd.f32 %v1334, 1.0
        %v1399 = vadd.f32 %v1335, 1.0
        %v1400 = vadd.f32 %v1336, 1.0
        %v1401 = vadd.f32 %v1337, 1.0
        %v1402 = vadd.f32 %v1338, 1.0
        %v1403 = vadd.f32 %v1339, 1.0
        %v1404 = vadd.f32 %v1340, 1.0
        %v1405 = vadd.f32 %v1341, 1.0
        %v1406 = vadd.f32 %v1342, 1.0
        %v1407 = vadd.f32 %v1343, 1.0
        %v1408 = vadd.f32 %v1344, 1.0
        %v1409 = vadd.f32 %v1345, 1.0
        %v1410 = vadd.f32 %v1346, 1.0
        %v1411 = vadd.f32 %v1347, 1.0
        %v1412 = vadd.f32 %v1348, 1.0
        %v1413 = vadd.f32 %v1349, 1.0
        %v1414 = vadd.f32 %v1350, 1.0
        %v1415 = vadd.f32 %v1351, 1.0
        %v1416 = vadd.f32 %v1352, 1.0
        %v1417 = vadd.f32 %v1353, 1.0
        %v1418 = vadd.f32 %v1354, 1.0
        %v1419 = vadd.f32 %v1355, 1.0
        %v1420 = vadd.f32 %v1356, 1.0
        %v1421 = vadd.f32 %v1357, 1.0
        %v1422 = vadd.f32 %v1358, 1.0
        %v1423 = vadd.f32 %v1359, 1.0
        %v1424 = vadd.f32 %v1360, 1.0
        %v1425 = vadd.f32 %v1361, 1.0
        %v1426 = vadd.f32 %v1362, 1.0
        %v1427 = vadd.f32 %v1363, 1.0
        %v1428 = vmul.f32 %v1364, 0.5
        %v1429 = vmul.f32 %v1365, 0.5
        %v1430 = vmul.f32 %v1366, 0.5
        %v1431 = vmul.f32 %v1367, 0.5
        %v1432 = vmul.f32 %v1368, 0.5
        %v1433 = vmul.f32 %v1369, 0.5
        %v1434 = vmul.f32 %v1370, 0.5
        %v1435 = vmul.f32 %v1371, 0.5
        %v1436 = vmul.f32 %v1372, 0.5
        %v1437 = vmul.f32 %v1373, 0.5
        %v1438 = vmul.f32 %v1374, 0.5
        %v1439 = vmul.f32 %v1375, 0.5
        %v1440 = vmul.f32 %v1376, 0.5
        %v1441 = vmul.f32 %v1377, 0.5
        %v1442 = vmul.f32 %v1378, 0.5
        %v1443 = vmul.f32 %v1379, 0.5
        %v1444 = vmul.f32 %v1380, 0.5
        %v1445 = vmul.f32 %v1381, 0.5
        %v1446 = vmul.f32 %v1382, 0.5
        %v1447 = vmul.f32 %v1383, 0.5
        %v1448 = vmul.f32 %v1384, 0.5
        %v1449 = vmul.f32 %v1385, 0.5
        %v1450 = vmul.f32 %v1386, 0.5
        %v1451 = vmul.f32 %v1387, 0.5
        %v1452 = vmul.f32 %v1388, 0.5
        %v1453 = vmul.f32 %v1389, 0.5
        %v1454 = vmul.f32 %v1390, 0.5
        %v1455 = vmul.f32 %v1391, 0.5
        %v1456 = vmul.f32 %v1392, 0.5
        %v1457 = vmul.f32 %v1393, 0.5
        %v1458 = vmul.f32 %v1394, 0.5
        %v1459 = vmul.f32 %v1395, 0.5
        %v1460 = vmul.f32 %v1396, 0.5
        %v1461 = vmul.f32 %v1397, 0.5
        %v1462 = vmul.f32 %v1398, 0.5
        %v1463 = vmul.f32 %v1399, 0.5
        %v1464 = vmul.f32 %v1400, 0.5
        %v1465 = vmul.f32 %v1401, 0.5
        %v1466 = vmul.f32 %v1402, 0.5
        %v1467 = vmul.f32 %v1403, 0.5
        %v1468 = vmul.f32 %v1404, 0.5
        %v1469 = vmul.f32 %v1405, 0.5
        %v1470 = vmul.f32 %v1406, 0.5
        %v1471 = vmul.f32 %v1407, 0.5
        %v1472 = vmul.f32 %v1408, 0.5
        %v1473 = vmul.f32 %v1409, 0.5
        %v1474 = vmul.f32 %v1410, 0.5
        %v1475 = vmul.f32 %v1411, 0.5
        %v1476 = vmul.f32 %v1412, 0.5
        %v1477 = vmul.f32 %v1413, 0.5
        %v1478 = vmul.f32 %v1414, 0.5
        %v1479 = vmul.f32 %v1415, 0.5
        %v1480 = vmul.f32 %v1416, 0.5
        %v1481 = vmul.f32 %v1417, 0.5
        %v1482 = vmul.f32 %v1418, 0.5
        %v1483 = vmul.f32 %v1419, 0.5
        %v1484 = vmul.f32 %v1420, 0.5
        %v1485 = vmul.f32 %v1421, 0.5
        %v1486 = vmul.f32 %v1422, 0.5
        %v1487 = vmul.f32 %v1423, 0.5
        %v1488 = vmul.f32 %v1424, 0.5
        %v1489 = vmul.f32 %v1425, 0.5
        %v1490 = vmul.f32 %v1426, 0.5
        %v1491 = vmul.f32 %v1427, 0.5
        %v1492 = vmul.f32 %v789, %v1428
        %v1493 = vmul.f32 %v791, %v1429
        %v1494 = vmul.f32 %v902, %v1430
        %v1495 = vmul.f32 %v904, %v1431
        %v1496 = vmul.f32 %v793, %v1432
        %v1497 = vmul.f32 %v795, %v1433
        %v1498 = vmul.f32 %v906, %v1434
        %v1499 = vmul.f32 %v908, %v1435
        %v1500 = vmul.f32 %v799, %v1436
        %v1501 = vmul.f32 %v801, %v1437
        %v1502 = vmul.f32 %v912, %v1438
        %v1503 = vmul.f32 %v914, %v1439
        %v1504 = vmul.f32 %v803, %v1440
        %v1505 = vmul.f32 %v805, %v1441
        %v1506 = vmul.f32 %v916, %v1442
        %v1507 = vmul.f32 %v918, %v1443
        %v1508 = vmul.f32 %v809, %v1444
        %v1509 = vmul.f32 %v811, %v1445
        %v1510 = vmul.f32 %v922, %v1446
        %v1511 = vmul.f32 %v924, %v1447
        %v1512 = vmul.f32 %v813, %v1448
        %v1513 = vmul.f32 %v815, %v1449
        %v1514 = vmul.f32 %v926, %v1450
        %v1515 = vmul.f32 %v928, %v1451
        %v1516 = vmul.f32 %v819, %v1452
        %v1517 = vmul.f32 %v821, %v1453
        %v1518 = vmul.f32 %v932, %v1454
        %v1519 = vmul.f32 %v934, %v1455
        %v1520 = vmul.f32 %v823, %v1456
        %v1521 = vmul.f32 %v825, %v1457
        %v1522 = vmul.f32 %v936, %v1458
        %v1523 = vmul.f32 %v938, %v1459
        %v1524 = vmul.f32 %v829, %v1460
        %v1525 = vmul.f32 %v831, %v1461
        %v1526 = vmul.f32 %v942, %v1462
        %v1527 = vmul.f32 %v944, %v1463
        %v1528 = vmul.f32 %v833, %v1464
        %v1529 = vmul.f32 %v835, %v1465
        %v1530 = vmul.f32 %v946, %v1466
        %v1531 = vmul.f32 %v948, %v1467
        %v1532 = vmul.f32 %v839, %v1468
        %v1533 = vmul.f32 %v841, %v1469
        %v1534 = vmul.f32 %v952, %v1470
        %v1535 = vmul.f32 %v954, %v1471
        %v1536 = vmul.f32 %v843, %v1472
        %v1537 = vmul.f32 %v845, %v1473
        %v1538 = vmul.f32 %v956, %v1474
        %v1539 = vmul.f32 %v958, %v1475
        %v1540 = vmul.f32 %v849, %v1476
        %v1541 = vmul.f32 %v851, %v1477
        %v1542 = vmul.f32 %v962, %v1478
        %v1543 = vmul.f32 %v964, %v1479
        %v1544 = vmul.f32 %v853, %v1480
        %v1545 = vmul.f32 %v855, %v1481
        %v1546 = vmul.f32 %v966, %v1482
        %v1547 = vmul.f32 %v968, %v1483
        %v1548 = vmul.f32 %v859, %v1484
        %v1549 = vmul.f32 %v861, %v1485
        %v1550 = vmul.f32 %v972, %v1486
        %v1551 = vmul.f32 %v974, %v1487
        %v1552 = vmul.f32 %v863, %v1488
        %v1553 = vmul.f32 %v865, %v1489
        %v1554 = vmul.f32 %v976, %v1490
        %v1555 = vmul.f32 %v978, %v1491
        %v1556 = vpack.c.bf16 %v1496, %v1492
        %v1557 = vpack.c.bf16 %v1497, %v1493
        %v1558 = vpack.c.bf16 %v1498, %v1494
        %v1559 = vpack.c.bf16 %v1499, %v1495
        %v1560 = vpack.c.bf16 %v1504, %v1500
        %v1561 = vpack.c.bf16 %v1505, %v1501
        %v1562 = vpack.c.bf16 %v1506, %v1502
        %v1563 = vpack.c.bf16 %v1507, %v1503
        %v1564 = vpack.c.bf16 %v1512, %v1508
        %v1565 = vpack.c.bf16 %v1513, %v1509
        %v1566 = vpack.c.bf16 %v1514, %v1510
        %v1567 = vpack.c.bf16 %v1515, %v1511
        %v1568 = vpack.c.bf16 %v1520, %v1516
        %v1569 = vpack.c.bf16 %v1521, %v1517
        %v1570 = vpack.c.bf16 %v1522, %v1518
        %v1571 = vpack.c.bf16 %v1523, %v1519
        %v1572 = vpack.c.bf16 %v1528, %v1524
        %v1573 = vpack.c.bf16 %v1529, %v1525
        %v1574 = vpack.c.bf16 %v1530, %v1526
        %v1575 = vpack.c.bf16 %v1531, %v1527
        %v1576 = vpack.c.bf16 %v1536, %v1532
        %v1577 = vpack.c.bf16 %v1537, %v1533
        %v1578 = vpack.c.bf16 %v1538, %v1534
        %v1579 = vpack.c.bf16 %v1539, %v1535
        %v1580 = vpack.c.bf16 %v1544, %v1540
        %v1581 = vpack.c.bf16 %v1545, %v1541
        %v1582 = vpack.c.bf16 %v1546, %v1542
        %v1583 = vpack.c.bf16 %v1547, %v1543
        %v1584 = vpack.c.bf16 %v1552, %v1548
        %v1585 = vpack.c.bf16 %v1553, %v1549
        %v1586 = vpack.c.bf16 %v1554, %v1550
        %v1587 = vpack.c.bf16 %v1555, %v1551
        %v1589 = vlaneseq
        %v1590 = vshrl.u32 %v1589, 7
        %v1591 = vsub.s32 0, %v1590
        %v1592 = vrot.slane %v340, %v1591
        %v1658 = vunpack.c.l.b16 %v276
        %v1659 = vunpack.c.l.b16 %v277
        %v1660 = vunpack.c.l.b16 %v278
        %v1661 = vunpack.c.l.b16 %v279
        %v1662 = vunpack.c.l.b16 %v280
        %v1663 = vunpack.c.l.b16 %v281
        %v1664 = vunpack.c.l.b16 %v282
        %v1665 = vunpack.c.l.b16 %v283
        %v1666 = vunpack.c.l.b16 %v284
        %v1667 = vunpack.c.l.b16 %v285
        %v1668 = vunpack.c.l.b16 %v286
        %v1669 = vunpack.c.l.b16 %v287
        %v1670 = vunpack.c.l.b16 %v288
        %v1671 = vunpack.c.l.b16 %v289
        %v1672 = vunpack.c.l.b16 %v290
        %v1673 = vunpack.c.l.b16 %v291
        %v1674 = vunpack.c.l.b16 %v292
        %v1675 = vunpack.c.l.b16 %v293
        %v1676 = vunpack.c.l.b16 %v294
        %v1677 = vunpack.c.l.b16 %v295
        %v1678 = vunpack.c.l.b16 %v296
        %v1679 = vunpack.c.l.b16 %v297
        %v1680 = vunpack.c.l.b16 %v298
        %v1681 = vunpack.c.l.b16 %v299
        %v1682 = vunpack.c.l.b16 %v300
        %v1683 = vunpack.c.l.b16 %v301
        %v1684 = vunpack.c.l.b16 %v302
        %v1685 = vunpack.c.l.b16 %v303
        %v1686 = vunpack.c.l.b16 %v304
        %v1687 = vunpack.c.l.b16 %v305
        %v1688 = vunpack.c.l.b16 %v306
        %v1689 = vunpack.c.l.b16 %v307
        %v1690 = vunpack.c.l.b16 %v308
        %v1691 = vunpack.c.l.b16 %v309
        %v1692 = vunpack.c.l.b16 %v310
        %v1693 = vunpack.c.l.b16 %v311
        %v1694 = vunpack.c.l.b16 %v312
        %v1695 = vunpack.c.l.b16 %v313
        %v1696 = vunpack.c.l.b16 %v314
        %v1697 = vunpack.c.l.b16 %v315
        %v1698 = vunpack.c.l.b16 %v316
        %v1699 = vunpack.c.l.b16 %v317
        %v1700 = vunpack.c.l.b16 %v318
        %v1701 = vunpack.c.l.b16 %v319
        %v1702 = vunpack.c.l.b16 %v320
        %v1703 = vunpack.c.l.b16 %v321
        %v1704 = vunpack.c.l.b16 %v322
        %v1705 = vunpack.c.l.b16 %v323
        %v1706 = vunpack.c.l.b16 %v324
        %v1707 = vunpack.c.l.b16 %v325
        %v1708 = vunpack.c.l.b16 %v326
        %v1709 = vunpack.c.l.b16 %v327
        %v1710 = vunpack.c.l.b16 %v328
        %v1711 = vunpack.c.l.b16 %v329
        %v1712 = vunpack.c.l.b16 %v330
        %v1713 = vunpack.c.l.b16 %v331
        %v1714 = vunpack.c.l.b16 %v332
        %v1715 = vunpack.c.l.b16 %v333
        %v1716 = vunpack.c.l.b16 %v334
        %v1717 = vunpack.c.l.b16 %v335
        %v1718 = vunpack.c.l.b16 %v336
        %v1719 = vunpack.c.l.b16 %v337
        %v1720 = vunpack.c.l.b16 %v338
        %v1721 = vunpack.c.l.b16 %v339
        %v1722 = vpack.c.b16 %v1659, %v1658
        %v1723 = vpack.c.b16 %v1661, %v1660
        %v1724 = vpack.c.b16 %v1663, %v1662
        %v1725 = vpack.c.b16 %v1665, %v1664
        %v1726 = vpack.c.b16 %v1667, %v1666
        %v1727 = vpack.c.b16 %v1669, %v1668
        %v1728 = vpack.c.b16 %v1671, %v1670
        %v1729 = vpack.c.b16 %v1673, %v1672
        %v1730 = vpack.c.b16 %v1675, %v1674
        %v1731 = vpack.c.b16 %v1677, %v1676
        %v1732 = vpack.c.b16 %v1679, %v1678
        %v1733 = vpack.c.b16 %v1681, %v1680
        %v1734 = vpack.c.b16 %v1683, %v1682
        %v1735 = vpack.c.b16 %v1685, %v1684
        %v1736 = vpack.c.b16 %v1687, %v1686
        %v1737 = vpack.c.b16 %v1689, %v1688
        %v1738 = vpack.c.b16 %v1691, %v1690
        %v1739 = vpack.c.b16 %v1693, %v1692
        %v1740 = vpack.c.b16 %v1695, %v1694
        %v1741 = vpack.c.b16 %v1697, %v1696
        %v1742 = vpack.c.b16 %v1699, %v1698
        %v1743 = vpack.c.b16 %v1701, %v1700
        %v1744 = vpack.c.b16 %v1703, %v1702
        %v1745 = vpack.c.b16 %v1705, %v1704
        %v1746 = vpack.c.b16 %v1707, %v1706
        %v1747 = vpack.c.b16 %v1709, %v1708
        %v1748 = vpack.c.b16 %v1711, %v1710
        %v1749 = vpack.c.b16 %v1713, %v1712
        %v1750 = vpack.c.b16 %v1715, %v1714
        %v1751 = vpack.c.b16 %v1717, %v1716
        %v1752 = vpack.c.b16 %v1719, %v1718
        %v1753 = vpack.c.b16 %v1721, %v1720
        %1786 = vmatprep.subr.bf16.mxu0 0
        %1787 = vmatpush1.bf16.msra.mxu0 %v1729
        %1788 = vmatprep.subr.bf16.mxu0 0
        %1789 = vmatpush1.bf16.msra.mxu0 %v1728
        %1790 = vmatprep.subr.bf16.mxu0 0
        %1791 = vmatpush1.bf16.msra.mxu0 %v1727
        %1792 = vmatprep.subr.bf16.mxu0 0
        %1793 = vmatpush1.bf16.msra.mxu0 %v1726
        %1794 = vmatprep.subr.bf16.mxu0 0
        %1795 = vmatpush1.bf16.msra.mxu0 %v1725
        %1796 = vmatprep.subr.bf16.mxu0 0
        %1797 = vmatpush1.bf16.msra.mxu0 %v1724
        %1798 = vmatprep.subr.bf16.mxu0 0
        %1799 = vmatpush1.bf16.msra.mxu0 %v1723
        %1800 = vmatprep.subr.bf16.mxu0 0
        %1801 = vmatpush1.bf16.msra.mxu0 %v1722
        %1802 = vmatprep.subr.bf16.mxu0 0
        %1803 = vmatpush2.bf16.msra.mxu0 %v1737
        %1804 = vmatprep.subr.bf16.mxu0 0
        %1805 = vmatpush2.bf16.msra.mxu0 %v1736
        %1806 = vmatprep.subr.bf16.mxu0 0
        %1807 = vmatpush2.bf16.msra.mxu0 %v1735
        %1808 = vmatprep.subr.bf16.mxu0 0
        %1809 = vmatpush2.bf16.msra.mxu0 %v1734
        %1810 = vmatprep.subr.bf16.mxu0 0
        %1811 = vmatpush2.bf16.msra.mxu0 %v1733
        %1812 = vmatprep.subr.bf16.mxu0 0
        %1813 = vmatpush2.bf16.msra.mxu0 %v1732
        %1814 = vmatprep.subr.bf16.mxu0 0
        %1815 = vmatpush2.bf16.msra.mxu0 %v1731
        %1816 = vmatprep.subr.bf16.mxu0 0
        %1817 = vmatpush2.bf16.msra.mxu0 %v1730
        %1818 = vmatprep.mubr.bf16.mxu0 %v1557
        %1819 = vmatmul.mubr.bf16.gmra.mxu0 %v1556
        %v1820 = vpop.f32.mrf.mxu0
        %v1821 = vadd.f32 %v1592, %v1820
        %v1822 = vpop.f32.mrf.mxu0
        %v1823 = vpop.f32.mrf.mxu0
        %v1824 = vadd.f32 %v1592, %v1823
        %v1825 = vpop.f32.mrf.mxu0
        %1826 = vmatprep.mubr.bf16.mxu0 %v1561
        %1827 = vmatmul.mubr.bf16.gmra.mxu0 %v1560
        %v1828 = vpop.f32.mrf.mxu0
        %v1829 = vadd.f32 %v1592, %v1828
        %v1830 = vpop.f32.mrf.mxu0
        %v1831 = vpop.f32.mrf.mxu0
        %v1832 = vadd.f32 %v1592, %v1831
        %v1833 = vpop.f32.mrf.mxu0
        %1834 = vmatprep.mubr.bf16.mxu0 %v1565
        %1835 = vmatmul.mubr.bf16.gmra.mxu0 %v1564
        %v1836 = vpop.f32.mrf.mxu0
        %v1837 = vadd.f32 %v1592, %v1836
        %v1838 = vpop.f32.mrf.mxu0
        %v1839 = vpop.f32.mrf.mxu0
        %v1840 = vadd.f32 %v1592, %v1839
        %v1841 = vpop.f32.mrf.mxu0
        %1842 = vmatprep.mubr.bf16.mxu0 %v1569
        %1843 = vmatmul.mubr.bf16.gmra.mxu0 %v1568
        %v1844 = vpop.f32.mrf.mxu0
        %v1845 = vadd.f32 %v1592, %v1844
        %v1846 = vpop.f32.mrf.mxu0
        %v1847 = vpop.f32.mrf.mxu0
        %v1848 = vadd.f32 %v1592, %v1847
        %v1849 = vpop.f32.mrf.mxu0
        %1850 = vmatprep.mubr.bf16.mxu0 %v1573
        %1851 = vmatmul.mubr.bf16.gmra.mxu0 %v1572
        %v1852 = vpop.f32.mrf.mxu0
        %v1853 = vadd.f32 %v1592, %v1852
        %v1854 = vpop.f32.mrf.mxu0
        %v1855 = vpop.f32.mrf.mxu0
        %v1856 = vadd.f32 %v1592, %v1855
        %v1857 = vpop.f32.mrf.mxu0
        %1858 = vmatprep.mubr.bf16.mxu0 %v1577
        %1859 = vmatmul.mubr.bf16.gmra.mxu0 %v1576
        %v1860 = vpop.f32.mrf.mxu0
        %v1861 = vadd.f32 %v1592, %v1860
        %v1862 = vpop.f32.mrf.mxu0
        %v1863 = vpop.f32.mrf.mxu0
        %v1864 = vadd.f32 %v1592, %v1863
        %v1865 = vpop.f32.mrf.mxu0
        %1866 = vmatprep.mubr.bf16.mxu0 %v1581
        %1867 = vmatmul.mubr.bf16.gmra.mxu0 %v1580
        %v1868 = vpop.f32.mrf.mxu0
        %v1869 = vadd.f32 %v1592, %v1868
        %v1870 = vpop.f32.mrf.mxu0
        %v1871 = vpop.f32.mrf.mxu0
        %v1872 = vadd.f32 %v1592, %v1871
        %v1873 = vpop.f32.mrf.mxu0
        %1874 = vmatprep.mubr.bf16.mxu0 %v1585
        %1875 = vmatmul.mubr.bf16.gmra.mxu0 %v1584
        %v1876 = vpop.f32.mrf.mxu0
        %v1877 = vadd.f32 %v1592, %v1876
        %v1878 = vpop.f32.mrf.mxu0
        %v1879 = vpop.f32.mrf.mxu0
        %v1880 = vadd.f32 %v1592, %v1879
        %v1881 = vpop.f32.mrf.mxu0
        %1882 = vdwg.mxu0
        %1883 = vmatprep.subr.bf16.mxu0 0
        %1884 = vmatpush1.bf16.msra.mxu0 %v1745
        %1885 = vmatprep.subr.bf16.mxu0 0
        %1886 = vmatpush1.bf16.msra.mxu0 %v1744
        %1887 = vmatprep.subr.bf16.mxu0 0
        %1888 = vmatpush1.bf16.msra.mxu0 %v1743
        %1889 = vmatprep.subr.bf16.mxu0 0
        %1890 = vmatpush1.bf16.msra.mxu0 %v1742
        %1891 = vmatprep.subr.bf16.mxu0 0
        %1892 = vmatpush1.bf16.msra.mxu0 %v1741
        %1893 = vmatprep.subr.bf16.mxu0 0
        %1894 = vmatpush1.bf16.msra.mxu0 %v1740
        %1895 = vmatprep.subr.bf16.mxu0 0
        %1896 = vmatpush1.bf16.msra.mxu0 %v1739
        %1897 = vmatprep.subr.bf16.mxu0 0
        %1898 = vmatpush1.bf16.msra.mxu0 %v1738
        %1899 = vmatprep.subr.bf16.mxu0 0
        %1900 = vmatpush2.bf16.msra.mxu0 %v1753
        %1901 = vmatprep.subr.bf16.mxu0 0
        %1902 = vmatpush2.bf16.msra.mxu0 %v1752
        %1903 = vmatprep.subr.bf16.mxu0 0
        %1904 = vmatpush2.bf16.msra.mxu0 %v1751
        %1905 = vmatprep.subr.bf16.mxu0 0
        %1906 = vmatpush2.bf16.msra.mxu0 %v1750
        %1907 = vmatprep.subr.bf16.mxu0 0
        %1908 = vmatpush2.bf16.msra.mxu0 %v1749
        %1909 = vmatprep.subr.bf16.mxu0 0
        %1910 = vmatpush2.bf16.msra.mxu0 %v1748
        %1911 = vmatprep.subr.bf16.mxu0 0
        %1912 = vmatpush2.bf16.msra.mxu0 %v1747
        %1913 = vmatprep.subr.bf16.mxu0 0
        %1914 = vmatpush2.bf16.msra.mxu0 %v1746
        %1915 = vmatprep.mubr.bf16.mxu0 %v1559
        %1916 = vmatmul.mubr.bf16.gmra.mxu0 %v1558
        %v1917 = vpop.f32.mrf.mxu0
        %v1918 = vadd.f32 %v1821, %v1917
        %v1919 = vpop.f32.mrf.mxu0
        %v1920 = vpop.f32.mrf.mxu0
        %v1921 = vadd.f32 %v1824, %v1920
        %v1922 = vpop.f32.mrf.mxu0
        %1923 = vmatprep.mubr.bf16.mxu0 %v1563
        %1924 = vmatmul.mubr.bf16.gmra.mxu0 %v1562
        %v1925 = vpop.f32.mrf.mxu0
        %v1926 = vadd.f32 %v1829, %v1925
        %v1927 = vpop.f32.mrf.mxu0
        %v1928 = vpop.f32.mrf.mxu0
        %v1929 = vadd.f32 %v1832, %v1928
        %v1930 = vpop.f32.mrf.mxu0
        %1931 = vmatprep.mubr.bf16.mxu0 %v1567
        %1932 = vmatmul.mubr.bf16.gmra.mxu0 %v1566
        %v1933 = vpop.f32.mrf.mxu0
        %v1934 = vadd.f32 %v1837, %v1933
        %v1935 = vpop.f32.mrf.mxu0
        %v1936 = vpop.f32.mrf.mxu0
        %v1937 = vadd.f32 %v1840, %v1936
        %v1938 = vpop.f32.mrf.mxu0
        %1939 = vmatprep.mubr.bf16.mxu0 %v1571
        %1940 = vmatmul.mubr.bf16.gmra.mxu0 %v1570
        %v1941 = vpop.f32.mrf.mxu0
        %v1942 = vadd.f32 %v1845, %v1941
        %v1943 = vpop.f32.mrf.mxu0
        %v1944 = vpop.f32.mrf.mxu0
        %v1945 = vadd.f32 %v1848, %v1944
        %v1946 = vpop.f32.mrf.mxu0
        %1947 = vmatprep.mubr.bf16.mxu0 %v1575
        %1948 = vmatmul.mubr.bf16.gmra.mxu0 %v1574
        %v1949 = vpop.f32.mrf.mxu0
        %v1950 = vadd.f32 %v1853, %v1949
        %v1951 = vpop.f32.mrf.mxu0
        %v1952 = vpop.f32.mrf.mxu0
        %v1953 = vadd.f32 %v1856, %v1952
        %v1954 = vpop.f32.mrf.mxu0
        %1955 = vmatprep.mubr.bf16.mxu0 %v1579
        %1956 = vmatmul.mubr.bf16.gmra.mxu0 %v1578
        %v1957 = vpop.f32.mrf.mxu0
        %v1958 = vadd.f32 %v1861, %v1957
        %v1959 = vpop.f32.mrf.mxu0
        %v1960 = vpop.f32.mrf.mxu0
        %v1961 = vadd.f32 %v1864, %v1960
        %v1962 = vpop.f32.mrf.mxu0
        %1963 = vmatprep.mubr.bf16.mxu0 %v1583
        %1964 = vmatmul.mubr.bf16.gmra.mxu0 %v1582
        %v1965 = vpop.f32.mrf.mxu0
        %v1966 = vadd.f32 %v1869, %v1965
        %v1967 = vpop.f32.mrf.mxu0
        %v1968 = vpop.f32.mrf.mxu0
        %v1969 = vadd.f32 %v1872, %v1968
        %v1970 = vpop.f32.mrf.mxu0
        %1971 = vmatprep.mubr.bf16.mxu0 %v1587
        %1972 = vmatmul.mubr.bf16.gmra.mxu0 %v1586
        %v1973 = vpop.f32.mrf.mxu0
        %v1974 = vadd.f32 %v1877, %v1973
        %v1975 = vpop.f32.mrf.mxu0
        %v1976 = vpop.f32.mrf.mxu0
        %v1977 = vadd.f32 %v1880, %v1976
        %v1978 = vpop.f32.mrf.mxu0
        %1979 = vdwg.mxu0
        %v1980 = vadd.f32 %v1918, %v227
        %v1981 = vadd.f32 %v1921, %v228
        %v1982 = vadd.f32 %v1926, %v229
        %v1983 = vadd.f32 %v1929, %v230
        %v1984 = vadd.f32 %v1934, %v231
        %v1985 = vadd.f32 %v1937, %v232
        %v1986 = vadd.f32 %v1942, %v233
        %v1987 = vadd.f32 %v1945, %v234
        %v1988 = vadd.f32 %v1950, %v235
        %v1989 = vadd.f32 %v1953, %v236
        %v1990 = vadd.f32 %v1958, %v237
        %v1991 = vadd.f32 %v1961, %v238
        %v1992 = vadd.f32 %v1966, %v239
        %v1993 = vadd.f32 %v1969, %v240
        %v1994 = vadd.f32 %v1974, %v241
        %v1995 = vadd.f32 %v1977, %v242
        %1996 = vst [vmem:[%s218] sm:$0xff] %v1980
        %1997 = vst [vmem:[%s218 + $0x8] sm:$0xff] %v1981
        %1998 = vst [vmem:[%s218 + $0x10] sm:$0xff] %v1982
        %1999 = vst [vmem:[%s218 + $0x18] sm:$0xff] %v1983
        %2000 = vst [vmem:[%s218 + $0x20] sm:$0xff] %v1984
        %2001 = vst [vmem:[%s218 + $0x28] sm:$0xff] %v1985
        %2002 = vst [vmem:[%s218 + $0x30] sm:$0xff] %v1986
        %2003 = vst [vmem:[%s218 + $0x38] sm:$0xff] %v1987
        %2004 = vst [vmem:[%s218 + $0x40] sm:$0xff] %v1988
        %2005 = vst [vmem:[%s218 + $0x48] sm:$0xff] %v1989
        %2006 = vst [vmem:[%s218 + $0x50] sm:$0xff] %v1990
        %2007 = vst [vmem:[%s218 + $0x58] sm:$0xff] %v1991
        %2008 = vst [vmem:[%s218 + $0x60] sm:$0xff] %v1992
        %2009 = vst [vmem:[%s218 + $0x68] sm:$0xff] %v1993
        %2010 = vst [vmem:[%s218 + $0x70] sm:$0xff] %v1994
        %2011 = vst [vmem:[%s218 + $0x78] sm:$0xff] %v1995
        %s2012 = sand.u32 %s137, 1
        %s2013 = scalar_lea.sflag [#allocation3], %s2012
        %s2014 = sand.u32 %s137, 1
        %s2015 = smul.addr %s2014, 128
        %s2016 = scalar_lea.vmem [#allocation2], %s2015
        // Predicated region
        $region41: #{residual_ffn_forward.1} parent=39 // pred_check
          %p2017 = pneg %p147
        $region42: #{residual_ffn_forward.1} parent=39 // pred_check_branch
          %2019 = sbr.rel (%p2017) target = $region44
        $region43: #{residual_ffn_forward.1} parent=39 // pred_region
          %s2020 = smul.u32 16, %s19
          %s2022 = ssub.s32 2048, 2048
          %2023 = vsyncadd %s2013, %s2022
          %s2024 = smul.addr %s2020, 128
          %s2025 = scalar_lea.hbm %s5, %s2024
          %s2026 = sshll.u32 %s2016, 4
          %s2027 = int_to_ptr.vmem [resolvable:$true] %s2026
          %2032 = dma.vmem_to_hbm [thread:$0]  %s2027, 2048, %s2025, %s2013, 128, 128, 8
        $region44: #{residual_ffn_forward.1} parent=39 // pred_fallthru
          _
      $region40: #{residual_ffn_forward.1} parent=5 // pred_fallthru
        _
      %p2033 = scmp.le.s32.totalorder 2, %s14
      // Predicated region
      $region45: #{residual_ffn_forward.1} parent=5 // pred_check
        %p2034 = pneg %p2033
      $region46: #{residual_ffn_forward.1} parent=5 // pred_check_branch
        %2036 = sbr.rel (%p2034) target = $region48
      $region47: #{residual_ffn_forward.1} parent=5 // pred_region
        %s2037 = ssub.s32 %s14, 2
        // Predicated region
        $region49: #{residual_ffn_forward.1} parent=47 // pred_check
          %p2038 = pneg %p153
        $region50: #{residual_ffn_forward.1} parent=47 // pred_check_branch
          %2040 = sbr.rel (%p2038) target = $region52
        $region51: #{residual_ffn_forward.1} parent=47 // pred_region
          %s2041 = sand.u32 %s138, 1
          %s2042 = scalar_lea.sflag [#allocation3], %s2041
          %s2043 = sand.u32 %s138, 1
          %s2044 = smul.addr %s2043, 128
          %s2045 = scalar_lea.vmem [#allocation2], %s2044
          %2046 = dma.done %s2042, 2048
        $region52: #{residual_ffn_forward.1} parent=47 // pred_fallthru
          _
      $region48: #{residual_ffn_forward.1} parent=5 // pred_fallthru
        _
    $region6: #{residual_ffn_forward.1} parent=1 // loop_footer
      %s18 = sadd.s32 1, %s14
    $region7: #{residual_ffn_forward.1} parent=1 // loop_footer_branch
      %13 = sbr.rel target = $region3
    $region8: #{residual_ffn_forward.1} parent=1 // loop_exit
      _
    %2047 = vsyncpa [#allocation3], 1
    %s2048 = scalar_lea.sflag [#allocation3], 1
    %2049 = vsyncpa %s2048, 1

</llo_original>
